<compile_context>
chip_gen: v6e
topology: v6e:2x2x1
jax: 0.10.0
libtpu: 0.0.40
codegen_flags: <defaults>
</compile_context>

<pallas_src>
import functools

import jax
import jax.numpy as jnp
from jax import lax
from jax.experimental import pallas as pl
from jax.experimental.pallas import tpu as pltpu

NEG_INF = -1e30   # finite stand-in for float('-inf') masks
LN_EPS = 1e-5     # PyTorch LayerNorm default eps


# ----------------------------------------------------------------------------
# Fused decoder-layer kernel: grid=(batch,), one (S, D) slab per grid step.
# ----------------------------------------------------------------------------
def _decoder_layer_kernel(nhead, causal, *refs):
    if causal:
        (x_ref, pad_ref,
         g1_ref, b1_ref, wqkv_ref, bqkv_ref, wo_ref, bo_ref,
         g2_ref, b2_ref, wf1_ref, bf1_ref, wf2_ref, bf2_ref,
         o_ref) = refs
        am_ref = None
    else:
        (x_ref, pad_ref, am_ref,
         g1_ref, b1_ref, wqkv_ref, bqkv_ref, wo_ref, bo_ref,
         g2_ref, b2_ref, wf1_ref, bf1_ref, wf2_ref, bf2_ref,
         o_ref) = refs

    x = x_ref[0]                        # (S, D) f32
    S, D = x.shape
    H = nhead
    Hd = D // H
    bf16 = jnp.bfloat16

    def layer_norm(y, g, b):
        mu = jnp.mean(y, axis=-1, keepdims=True)
        var = jnp.mean((y - mu) ** 2, axis=-1, keepdims=True)
        return (y - mu) * lax.rsqrt(var + LN_EPS) * g + b       # rsqrt -> EUP

    # Combined additive mask (S,S): causal part built in-kernel (cheap VPU iota/select filler
    # under the MXU-bound attention) + per-batch (1,S) key-padding bias.
    if causal:
        rows = lax.broadcasted_iota(jnp.int32, (S, S), 0)
        cols = lax.broadcasted_iota(jnp.int32, (S, S), 1)
        mask = jnp.where(cols > rows, NEG_INF, 0.0) + pad_ref[0]
    else:
        mask = am_ref[...] + pad_ref[0]

    # ---- LN1 (module overwrites x, so the residual uses the LN output) -----------------
    x1 = layer_norm(x, g1_ref[...], b1_ref[...])

    # ---- fused QKV projection: one MXU pass, bf16 operands, f32 accumulate.
    #      1/sqrt(Hd) is pre-folded into the Q columns (see fold_attention_scale).
    qkv = jnp.dot(x1.astype(bf16), wqkv_ref[...],
                  preferred_element_type=jnp.float32) + bqkv_ref[...]
    qkv = qkv.astype(bf16)              # single cast pass (not per slice)
    q = qkv[:, :D]
    k = qkv[:, D:2 * D]
    v = qkv[:, 2 * D:]

    # ---- per-head attention; head contexts concatenated into one lane-dense (S,D) value
    ctx_heads = []
    for h in range(H):                  # static unroll; fine for small H
        sl = slice(h * Hd, (h + 1) * Hd)
        s = lax.dot_general(q[:, sl], k[:, sl],
                            (((1,), (1,)), ((), ())),
                            preferred_element_type=jnp.float32) + mask
        s = s - jnp.max(s, axis=-1, keepdims=True)
        p = jnp.exp(s)
        denom = jnp.maximum(jnp.sum(p, axis=-1, keepdims=True), 1e-30)  # NaN guard
        p = p * pl.reciprocal(denom, approx=True)                        # EUP, no VPU divide
        ctx_heads.append(jnp.dot(p.astype(bf16), v[:, sl],
                                 preferred_element_type=jnp.float32))
    ctx = jnp.concatenate(ctx_heads, axis=-1).astype(bf16)               # (S, D), lane-dense

    # ---- single full-width output projection (one (S,D)@(D,D) matmul) ------------------
    attn = jnp.dot(ctx, wo_ref[...],
                   preferred_element_type=jnp.float32) + bo_ref[...]
    x2 = x1 + attn

    # ---- LN2 + FFN (residual again uses the LN output, per the module) -----------------
    x3 = layer_norm(x2, g2_ref[...], b2_ref[...])
    h1 = jnp.maximum(
        jnp.dot(x3.astype(bf16), wf1_ref[...],
                preferred_element_type=jnp.float32) + bf1_ref[...], 0.0)
    ffn = jnp.dot(h1.astype(bf16), wf2_ref[...],
                  preferred_element_type=jnp.float32) + bf2_ref[...]
    o_ref[0] = (x3 + ffn).astype(o_ref.dtype)


# ----------------------------------------------------------------------------
# Specs / wrapper
# ----------------------------------------------------------------------------
def _const_spec(shape):
    """Constant-index block (same tile every grid step): single-buffer it."""
    nd = len(shape)
    index_map = lambda b, nd=nd: (0,) * nd
    try:
        return pl.BlockSpec(shape, index_map, pipeline_mode=pl.Buffered(1))
    except TypeError:                    # older jax without pipeline_mode kwarg
        return pl.BlockSpec(shape, index_map)


def _vmem_limit_bytes():
    """~85% of this generation's physical VMEM (capped at 112 MiB): headroom on v7x's 64 MiB,
    larger budget on v5e/v6e's 128 MiB."""
    try:
        cap = int(pltpu.get_tpu_info().vmem_capacity_bytes)
    except Exception:
        cap = 128 * 1024 * 1024
    return min(int(cap * 0.85), 112 * 1024 * 1024)


def fold_attention_scale(p, nhead):
    """Fold the 1/sqrt(head_dim) query scale into the Q block of the fused QKV weight/bias.
    Init-time weight transform (mathematically identical to PyTorch's runtime scaling)."""
    D = p['w_o'].shape[0]
    Hd = D // nhead
    scale = 1.0 / (Hd ** 0.5)
    w, b = p['w_qkv'], p['b_qkv']
    wq = (w[:, :D].astype(jnp.float32) * scale).astype(w.dtype)
    bq = b[:, :D] * scale
    return dict(p,
                w_qkv=jnp.concatenate([wq, w[:, D:]], axis=1),
                b_qkv=jnp.concatenate([bq, b[:, D:]], axis=1))


def decoder_layer(x, padding_mask, attn_mask, p, nhead, *, out_dtype=jnp.float32):
    """x: (B,S,D) f32; padding_mask: (B,S) bool (True = ignore key);
    attn_mask: (S,S) f32 additive mask, or None -> causal mask generated in-kernel.
    p: params with the Q scale already folded (see fold_attention_scale)."""
    B, S, D = x.shape
    causal = attn_mask is None
    # Per-batch key-padding bias, shaped (B,1,S) so its block equals the full last-two dims.
    pad_bias = jnp.where(padding_mask, NEG_INF, 0.0).astype(jnp.float32)[:, None, :]

    wlist = [p['g1'], p['b1'],
             p['w_qkv'], p['b_qkv'],
             p['w_o'], p['b_o'],
             p['g2'], p['b2'],
             p['w_ff1'], p['b_ff1'], p['w_ff2'], p['b_ff2']]

    data_specs = [pl.BlockSpec((1, S, D), lambda b: (b, 0, 0)),
                  pl.BlockSpec((1, 1, S), lambda b: (b, 0, 0))]
    args = [x, pad_bias]
    if not causal:
        data_specs.append(_const_spec((S, S)))       # DMA'd once, single-buffered
        args.append(attn_mask)
    args.extend(wlist)

    return pl.pallas_call(
        functools.partial(_decoder_layer_kernel, nhead, causal),
        out_shape=jax.ShapeDtypeStruct((B, S, D), out_dtype),
        grid=(B,),
        in_specs=data_specs + [_const_spec(w.shape) for w in wlist],
        out_specs=pl.BlockSpec((1, S, D), lambda b: (b, 0, 0)),
        compiler_params=pltpu.CompilerParams(
            dimension_semantics=("parallel",),        # batch items independent -> 2 TCs on v7x
            vmem_limit_bytes=_vmem_limit_bytes()),
    )(*args)


# ----------------------------------------------------------------------------
# Deterministic parameter init (weights pre-transposed to [in, out]; matmul weights in bf16,
# LayerNorm params and biases in f32). These are the *module* weights (Q scale NOT folded).
# ----------------------------------------------------------------------------
def init_params(key, d_model):
    ks = iter(jax.random.split(key, 16))

    def nrm(shape, scale=0.05, dtype=jnp.float32):
        return (scale * jax.random.normal(next(ks), shape)).astype(dtype)

    bf16 = jnp.bfloat16
    return dict(
        g1=jnp.ones((1, d_model), jnp.float32),
        b1=jnp.zeros((1, d_model), jnp.float32),
        w_qkv=nrm((d_model, 3 * d_model), dtype=bf16),   # [Wq^T | Wk^T | Wv^T]
        b_qkv=nrm((1, 3 * d_model)),
        w_o=nrm((d_model, d_model), dtype=bf16),
        b_o=nrm((1, d_model)),
        g2=jnp.ones((1, d_model), jnp.float32),
        b2=jnp.zeros((1, d_model), jnp.float32),
        w_ff1=nrm((d_model, 4 * d_model), dtype=bf16),
        b_ff1=nrm((1, 4 * d_model)),
        w_ff2=nrm((4 * d_model, d_model), dtype=bf16),
        b_ff2=nrm((1, d_model)),
    )


# ----------------------------------------------------------------------------
# Pure-JAX reference (PyTorch op order; mirrors the bf16-matmul / f32-accumulate policy)
# ----------------------------------------------------------------------------
def reference_decoder_layer(x, padding_mask, attn_mask, p, nhead):
    B, S, D = x.shape
    Hd = D // nhead
    bf = lambda a: a.astype(jnp.bfloat16)

    def ln(y, g, b):
        mu = y.mean(-1, keepdims=True)
        var = ((y - mu) ** 2).mean(-1, keepdims=True)
        return (y - mu) / jnp.sqrt(var + LN_EPS) * g + b

    mask = attn_mask[None] + jnp.where(padding_mask, NEG_INF, 0.0)[:, None, :]  # (B,S,S)

    x1 = ln(x, p['g1'], p['b1'])
    qkv = jnp.dot(bf(x1), p['w_qkv'], preferred_element_type=jnp.float32) + p['b_qkv']
    q = bf(qkv[..., :D] * (1.0 / (Hd ** 0.5))).reshape(B, S, nhead, Hd).transpose(0, 2, 1, 3)
    k = bf(qkv[..., D:2 * D]).reshape(B, S, nhead, Hd).transpose(0, 2, 1, 3)
    v = bf(qkv[..., 2 * D:]).reshape(B, S, nhead, Hd).transpose(0, 2, 1, 3)
    s = jnp.einsum('bhqd,bhkd->bhqk', q, k,
                   preferred_element_type=jnp.float32) + mask[:, None]
    a = jax.nn.softmax(s, axis=-1)
    ctx = jnp.einsum('bhqk,bhkd->bhqd', bf(a), v, preferred_element_type=jnp.float32)
    ctx = ctx.transpose(0, 2, 1, 3).reshape(B, S, D)
    attn = jnp.dot(bf(ctx), p['w_o'], preferred_element_type=jnp.float32) + p['b_o']
    x2 = x1 + attn
    x3 = ln(x2, p['g2'], p['b2'])
    h1 = jnp.maximum(jnp.dot(bf(x3), p['w_ff1'],
                             preferred_element_type=jnp.float32) + p['b_ff1'], 0.0)
    ffn = jnp.dot(bf(h1), p['w_ff2'], preferred_element_type=jnp.float32) + p['b_ff2']
    return x3 + ffn


# ----------------------------------------------------------------------------
if __name__ == "__main__":
    B, S, D, H = 2, 16, 128, 4          # small, lane-aligned demo shapes (Hd = 32)

    key = jax.random.PRNGKey(0)
    kp, kx = jax.random.split(key)
    params = init_params(kp, D)                      # module weights
    kparams = fold_attention_scale(params, H)        # kernel weights (Q scale folded)
    x = jax.random.normal(kx, (B, S, D), dtype=jnp.float32)

    # Float additive causal mask (like nn.Transformer.generate_square_subsequent_mask).
    attn_mask = jnp.triu(jnp.full((S, S), NEG_INF, jnp.float32), k=1)
    # key_padding_mask: True = padding (ignored); batch 0 no padding, batch 1 pads the tail.
    padding_mask = jnp.arange(S)[None, :] >= jnp.array([S, S - 4])[:, None]

    ref = reference_decoder_layer(x, padding_mask, attn_mask, params, H)

    # Path 1: causal mask generated in-kernel (no (S,S) mask DMA).
    out = decoder_layer(x, padding_mask, None, kparams, H)
    out = jax.block_until_ready(out)
    assert out.shape == (B, S, D)
    err = float(jnp.max(jnp.abs(out - ref)))
    assert jnp.allclose(out, ref, rtol=2e-2, atol=2e-2), err

    # Path 2: explicit additive attn_mask (DMA'd once, single-buffered).
    out2 = decoder_layer(x, padding_mask, attn_mask, kparams, H)
    out2 = jax.block_until_ready(out2)
    err2 = float(jnp.max(jnp.abs(out2 - ref)))
    assert jnp.allclose(out2, ref, rtol=2e-2, atol=2e-2), err2

    print("KERNEL_OK")
</pallas_src>

<mosaic_0001>
module attributes {stable_mosaic.version = 11 : i64} {
  func.func @_decoder_layer_kernel(%arg0: i32, %arg1: memref<1x16x128xf32, #tpu.memory_space<vmem>>, %arg2: memref<1x1x16xf32, #tpu.memory_space<vmem>>, %arg3: memref<1x128xf32, #tpu.memory_space<vmem>>, %arg4: memref<1x128xf32, #tpu.memory_space<vmem>>, %arg5: memref<128x384xbf16, #tpu.memory_space<vmem>>, %arg6: memref<1x384xf32, #tpu.memory_space<vmem>>, %arg7: memref<128x128xbf16, #tpu.memory_space<vmem>>, %arg8: memref<1x128xf32, #tpu.memory_space<vmem>>, %arg9: memref<1x128xf32, #tpu.memory_space<vmem>>, %arg10: memref<1x128xf32, #tpu.memory_space<vmem>>, %arg11: memref<128x512xbf16, #tpu.memory_space<vmem>>, %arg12: memref<1x512xf32, #tpu.memory_space<vmem>>, %arg13: memref<512x128xbf16, #tpu.memory_space<vmem>>, %arg14: memref<1x128xf32, #tpu.memory_space<vmem>>, %arg15: memref<1x16x128xf32, #tpu.memory_space<vmem>>) attributes {dimension_semantics = [#tpu.dimension_semantics<parallel>], iteration_bounds = array<i64: 2>, scalar_prefetch = 0 : i64, scratch_operands = 0 : i64, tpu.core_type = #tpu.core_type<tc>, window_params = [{transform_indices = @transform_0, window_bounds = array<i64: 1, 16, 128>}, {transform_indices = @transform_1, window_bounds = array<i64: 1, 1, 16>}, {pipeline_mode = #tpu.pipeline_mode<synchronous>, transform_indices = @transform_2, window_bounds = array<i64: 1, 128>}, {pipeline_mode = #tpu.pipeline_mode<synchronous>, transform_indices = @transform_3, window_bounds = array<i64: 1, 128>}, {pipeline_mode = #tpu.pipeline_mode<synchronous>, transform_indices = @transform_4, window_bounds = array<i64: 128, 384>}, {pipeline_mode = #tpu.pipeline_mode<synchronous>, transform_indices = @transform_5, window_bounds = array<i64: 1, 384>}, {pipeline_mode = #tpu.pipeline_mode<synchronous>, transform_indices = @transform_6, window_bounds = array<i64: 128, 128>}, {pipeline_mode = #tpu.pipeline_mode<synchronous>, transform_indices = @transform_7, window_bounds = array<i64: 1, 128>}, {pipeline_mode = #tpu.pipeline_mode<synchronous>, transform_indices = @transform_8, window_bounds = array<i64: 1, 128>}, {pipeline_mode = #tpu.pipeline_mode<synchronous>, transform_indices = @transform_9, window_bounds = array<i64: 1, 128>}, {pipeline_mode = #tpu.pipeline_mode<synchronous>, transform_indices = @transform_10, window_bounds = array<i64: 128, 512>}, {pipeline_mode = #tpu.pipeline_mode<synchronous>, transform_indices = @transform_11, window_bounds = array<i64: 1, 512>}, {pipeline_mode = #tpu.pipeline_mode<synchronous>, transform_indices = @transform_12, window_bounds = array<i64: 512, 128>}, {pipeline_mode = #tpu.pipeline_mode<synchronous>, transform_indices = @transform_13, window_bounds = array<i64: 1, 128>}, {transform_indices = @transform_14, window_bounds = array<i64: 1, 16, 128>}]} {
    %c0 = arith.constant 0 : index
    %c0_0 = arith.constant 0 : index
    %c0_1 = arith.constant 0 : index
    %0 = vector.load %arg1[%c0, %c0_0, %c0_1] : memref<1x16x128xf32, #tpu.memory_space<vmem>>, vector<1x16x128xf32>
    %1 = vector.shape_cast %0 : vector<1x16x128xf32> to vector<16x128xf32>
    %2 = tpu.iota {dimensions = array<i32: 0>} : vector<16x16xi32>
    %3 = tpu.iota {dimensions = array<i32: 1>} : vector<16x16xi32>
    %4 = arith.cmpi sgt, %3, %2 : vector<16x16xi32>
    %cst = arith.constant -1.000000e+30 : f32
    %cst_2 = arith.constant 0.000000e+00 : f32
    %5 = vector.broadcast %cst : f32 to vector<16x16xf32>
    %6 = vector.broadcast %cst_2 : f32 to vector<16x16xf32>
    %7 = arith.select %4, %5, %6 : vector<16x16xi1>, vector<16x16xf32>
    %c0_3 = arith.constant 0 : index
    %c0_4 = arith.constant 0 : index
    %c0_5 = arith.constant 0 : index
    %8 = vector.load %arg2[%c0_3, %c0_4, %c0_5] : memref<1x1x16xf32, #tpu.memory_space<vmem>>, vector<1x1x16xf32>
    %9 = vector.shape_cast %8 : vector<1x1x16xf32> to vector<1x16xf32>
    %10 = vector.broadcast %9 : vector<1x16xf32> to vector<16x16xf32>
    %11 = arith.addf %7, %10 : vector<16x16xf32>
    %c0_6 = arith.constant 0 : index
    %c0_7 = arith.constant 0 : index
    %12 = vector.load %arg3[%c0_6, %c0_7] : memref<1x128xf32, #tpu.memory_space<vmem>>, vector<1x128xf32>
    %c0_8 = arith.constant 0 : index
    %c0_9 = arith.constant 0 : index
    %13 = vector.load %arg4[%c0_8, %c0_9] : memref<1x128xf32, #tpu.memory_space<vmem>>, vector<1x128xf32>
    %cst_10 = arith.constant dense<0.000000e+00> : vector<16xf32>
    %14 = vector.multi_reduction <add>, %1, %cst_10 [1] : vector<16x128xf32> to vector<16xf32>
    %15 = vector.shape_cast %14 : vector<16xf32> to vector<16x1xf32>
    %cst_11 = arith.constant 1.280000e+02 : f32
    %16 = vector.broadcast %cst_11 : f32 to vector<16x1xf32>
    %17 = arith.divf %15, %16 : vector<16x1xf32>
    %18 = vector.broadcast %17 : vector<16x1xf32> to vector<16x128xf32>
    %19 = arith.subf %1, %18 : vector<16x128xf32>
    %20 = arith.mulf %19, %19 : vector<16x128xf32>
    %cst_12 = arith.constant dense<0.000000e+00> : vector<16xf32>
    %21 = vector.multi_reduction <add>, %20, %cst_12 [1] : vector<16x128xf32> to vector<16xf32>
    %22 = vector.shape_cast %21 : vector<16xf32> to vector<16x1xf32>
    %cst_13 = arith.constant 1.280000e+02 : f32
    %23 = vector.broadcast %cst_13 : f32 to vector<16x1xf32>
    %24 = arith.divf %22, %23 : vector<16x1xf32>
    %25 = vector.broadcast %17 : vector<16x1xf32> to vector<16x128xf32>
    %26 = arith.subf %1, %25 : vector<16x128xf32>
    %cst_14 = arith.constant 9.99999974E-6 : f32
    %27 = vector.broadcast %cst_14 : f32 to vector<16x1xf32>
    %28 = arith.addf %24, %27 : vector<16x1xf32>
    %29 = math.rsqrt %28 : vector<16x1xf32>
    %30 = vector.broadcast %29 : vector<16x1xf32> to vector<16x128xf32>
    %31 = arith.mulf %26, %30 : vector<16x128xf32>
    %32 = vector.broadcast %12 : vector<1x128xf32> to vector<16x128xf32>
    %33 = arith.mulf %31, %32 : vector<16x128xf32>
    %34 = vector.broadcast %13 : vector<1x128xf32> to vector<16x128xf32>
    %35 = arith.addf %33, %34 : vector<16x128xf32>
    %36 = arith.truncf %35 : vector<16x128xf32> to vector<16x128xbf16>
    %c0_15 = arith.constant 0 : index
    %c0_16 = arith.constant 0 : index
    %37 = vector.load %arg5[%c0_15, %c0_16] : memref<128x384xbf16, #tpu.memory_space<vmem>>, vector<128x384xbf16>
    %cst_17 = arith.constant dense<0.000000e+00> : vector<16x384xf32>
    %38 = tpu.matmul %36, %37, %cst_17 {dimension_numbers = #tpu.dot_dimension_numbers<[1], [0], [0], [1], [0, 0, 1, 1], [], []>} : vector<16x128xbf16>, vector<128x384xbf16>, vector<16x384xf32> -> vector<16x384xf32>
    %c0_18 = arith.constant 0 : index
    %c0_19 = arith.constant 0 : index
    %39 = vector.load %arg6[%c0_18, %c0_19] : memref<1x384xf32, #tpu.memory_space<vmem>>, vector<1x384xf32>
    %40 = vector.broadcast %39 : vector<1x384xf32> to vector<16x384xf32>
    %41 = arith.addf %38, %40 : vector<16x384xf32>
    %42 = arith.truncf %41 : vector<16x384xf32> to vector<16x384xbf16>
    %43 = vector.extract_strided_slice %42 {offsets = [0, 0], sizes = [16, 128], strides = [1, 1]} : vector<16x384xbf16> to vector<16x128xbf16>
    %44 = vector.extract_strided_slice %42 {offsets = [0, 128], sizes = [16, 128], strides = [1, 1]} : vector<16x384xbf16> to vector<16x128xbf16>
    %45 = vector.extract_strided_slice %42 {offsets = [0, 256], sizes = [16, 128], strides = [1, 1]} : vector<16x384xbf16> to vector<16x128xbf16>
    %46 = vector.extract_strided_slice %43 {offsets = [0, 0], sizes = [16, 32], strides = [1, 1]} : vector<16x128xbf16> to vector<16x32xbf16>
    %47 = vector.extract_strided_slice %44 {offsets = [0, 0], sizes = [16, 32], strides = [1, 1]} : vector<16x128xbf16> to vector<16x32xbf16>
    %cst_20 = arith.constant dense<0.000000e+00> : vector<16x16xf32>
    %48 = tpu.matmul %46, %47, %cst_20 {dimension_numbers = #tpu.dot_dimension_numbers<[1], [1], [0], [0], [0, 0, 1, 0], [], []>} : vector<16x32xbf16>, vector<16x32xbf16>, vector<16x16xf32> -> vector<16x16xf32>
    %49 = arith.addf %48, %11 : vector<16x16xf32>
    %cst_21 = arith.constant dense<0xFF800000> : vector<16xf32>
    %50 = vector.multi_reduction <maximumf>, %49, %cst_21 [1] : vector<16x16xf32> to vector<16xf32>
    %51 = vector.shape_cast %50 : vector<16xf32> to vector<16x1xf32>
    %52 = vector.broadcast %51 : vector<16x1xf32> to vector<16x16xf32>
    %53 = arith.subf %49, %52 : vector<16x16xf32>
    %54 = math.exp %53 : vector<16x16xf32>
    %cst_22 = arith.constant dense<0.000000e+00> : vector<16xf32>
    %55 = vector.multi_reduction <add>, %54, %cst_22 [1] : vector<16x16xf32> to vector<16xf32>
    %56 = vector.shape_cast %55 : vector<16xf32> to vector<16x1xf32>
    %cst_23 = arith.constant 1.000000e-30 : f32
    %57 = vector.broadcast %cst_23 : f32 to vector<16x1xf32>
    %58 = arith.maximumf %56, %57 : vector<16x1xf32>
    %59 = tpu.reciprocal %58 {approx = true} : vector<16x1xf32> -> vector<16x1xf32>
    %60 = vector.broadcast %59 : vector<16x1xf32> to vector<16x16xf32>
    %61 = arith.mulf %54, %60 : vector<16x16xf32>
    %62 = arith.truncf %61 : vector<16x16xf32> to vector<16x16xbf16>
    %63 = vector.extract_strided_slice %45 {offsets = [0, 0], sizes = [16, 32], strides = [1, 1]} : vector<16x128xbf16> to vector<16x32xbf16>
    %cst_24 = arith.constant dense<0.000000e+00> : vector<16x32xf32>
    %64 = tpu.matmul %62, %63, %cst_24 {dimension_numbers = #tpu.dot_dimension_numbers<[1], [0], [0], [1], [0, 0, 1, 1], [], []>} : vector<16x16xbf16>, vector<16x32xbf16>, vector<16x32xf32> -> vector<16x32xf32>
    %65 = vector.extract_strided_slice %43 {offsets = [0, 32], sizes = [16, 32], strides = [1, 1]} : vector<16x128xbf16> to vector<16x32xbf16>
    %66 = vector.extract_strided_slice %44 {offsets = [0, 32], sizes = [16, 32], strides = [1, 1]} : vector<16x128xbf16> to vector<16x32xbf16>
    %cst_25 = arith.constant dense<0.000000e+00> : vector<16x16xf32>
    %67 = tpu.matmul %65, %66, %cst_25 {dimension_numbers = #tpu.dot_dimension_numbers<[1], [1], [0], [0], [0, 0, 1, 0], [], []>} : vector<16x32xbf16>, vector<16x32xbf16>, vector<16x16xf32> -> vector<16x16xf32>
    %68 = arith.addf %67, %11 : vector<16x16xf32>
    %cst_26 = arith.constant dense<0xFF800000> : vector<16xf32>
    %69 = vector.multi_reduction <maximumf>, %68, %cst_26 [1] : vector<16x16xf32> to vector<16xf32>
    %70 = vector.shape_cast %69 : vector<16xf32> to vector<16x1xf32>
    %71 = vector.broadcast %70 : vector<16x1xf32> to vector<16x16xf32>
    %72 = arith.subf %68, %71 : vector<16x16xf32>
    %73 = math.exp %72 : vector<16x16xf32>
    %cst_27 = arith.constant dense<0.000000e+00> : vector<16xf32>
    %74 = vector.multi_reduction <add>, %73, %cst_27 [1] : vector<16x16xf32> to vector<16xf32>
    %75 = vector.shape_cast %74 : vector<16xf32> to vector<16x1xf32>
    %cst_28 = arith.constant 1.000000e-30 : f32
    %76 = vector.broadcast %cst_28 : f32 to vector<16x1xf32>
    %77 = arith.maximumf %75, %76 : vector<16x1xf32>
    %78 = tpu.reciprocal %77 {approx = true} : vector<16x1xf32> -> vector<16x1xf32>
    %79 = vector.broadcast %78 : vector<16x1xf32> to vector<16x16xf32>
    %80 = arith.mulf %73, %79 : vector<16x16xf32>
    %81 = arith.truncf %80 : vector<16x16xf32> to vector<16x16xbf16>
    %82 = vector.extract_strided_slice %45 {offsets = [0, 32], sizes = [16, 32], strides = [1, 1]} : vector<16x128xbf16> to vector<16x32xbf16>
    %cst_29 = arith.constant dense<0.000000e+00> : vector<16x32xf32>
    %83 = tpu.matmul %81, %82, %cst_29 {dimension_numbers = #tpu.dot_dimension_numbers<[1], [0], [0], [1], [0, 0, 1, 1], [], []>} : vector<16x16xbf16>, vector<16x32xbf16>, vector<16x32xf32> -> vector<16x32xf32>
    %84 = vector.extract_strided_slice %43 {offsets = [0, 64], sizes = [16, 32], strides = [1, 1]} : vector<16x128xbf16> to vector<16x32xbf16>
    %85 = vector.extract_strided_slice %44 {offsets = [0, 64], sizes = [16, 32], strides = [1, 1]} : vector<16x128xbf16> to vector<16x32xbf16>
    %cst_30 = arith.constant dense<0.000000e+00> : vector<16x16xf32>
    %86 = tpu.matmul %84, %85, %cst_30 {dimension_numbers = #tpu.dot_dimension_numbers<[1], [1], [0], [0], [0, 0, 1, 0], [], []>} : vector<16x32xbf16>, vector<16x32xbf16>, vector<16x16xf32> -> vector<16x16xf32>
    %87 = arith.addf %86, %11 : vector<16x16xf32>
    %cst_31 = arith.constant dense<0xFF800000> : vector<16xf32>
    %88 = vector.multi_reduction <maximumf>, %87, %cst_31 [1] : vector<16x16xf32> to vector<16xf32>
    %89 = vector.shape_cast %88 : vector<16xf32> to vector<16x1xf32>
    %90 = vector.broadcast %89 : vector<16x1xf32> to vector<16x16xf32>
    %91 = arith.subf %87, %90 : vector<16x16xf32>
    %92 = math.exp %91 : vector<16x16xf32>
    %cst_32 = arith.constant dense<0.000000e+00> : vector<16xf32>
    %93 = vector.multi_reduction <add>, %92, %cst_32 [1] : vector<16x16xf32> to vector<16xf32>
    %94 = vector.shape_cast %93 : vector<16xf32> to vector<16x1xf32>
    %cst_33 = arith.constant 1.000000e-30 : f32
    %95 = vector.broadcast %cst_33 : f32 to vector<16x1xf32>
    %96 = arith.maximumf %94, %95 : vector<16x1xf32>
    %97 = tpu.reciprocal %96 {approx = true} : vector<16x1xf32> -> vector<16x1xf32>
    %98 = vector.broadcast %97 : vector<16x1xf32> to vector<16x16xf32>
    %99 = arith.mulf %92, %98 : vector<16x16xf32>
    %100 = arith.truncf %99 : vector<16x16xf32> to vector<16x16xbf16>
    %101 = vector.extract_strided_slice %45 {offsets = [0, 64], sizes = [16, 32], strides = [1, 1]} : vector<16x128xbf16> to vector<16x32xbf16>
    %cst_34 = arith.constant dense<0.000000e+00> : vector<16x32xf32>
    %102 = tpu.matmul %100, %101, %cst_34 {dimension_numbers = #tpu.dot_dimension_numbers<[1], [0], [0], [1], [0, 0, 1, 1], [], []>} : vector<16x16xbf16>, vector<16x32xbf16>, vector<16x32xf32> -> vector<16x32xf32>
    %103 = vector.extract_strided_slice %43 {offsets = [0, 96], sizes = [16, 32], strides = [1, 1]} : vector<16x128xbf16> to vector<16x32xbf16>
    %104 = vector.extract_strided_slice %44 {offsets = [0, 96], sizes = [16, 32], strides = [1, 1]} : vector<16x128xbf16> to vector<16x32xbf16>
    %cst_35 = arith.constant dense<0.000000e+00> : vector<16x16xf32>
    %105 = tpu.matmul %103, %104, %cst_35 {dimension_numbers = #tpu.dot_dimension_numbers<[1], [1], [0], [0], [0, 0, 1, 0], [], []>} : vector<16x32xbf16>, vector<16x32xbf16>, vector<16x16xf32> -> vector<16x16xf32>
    %106 = arith.addf %105, %11 : vector<16x16xf32>
    %cst_36 = arith.constant dense<0xFF800000> : vector<16xf32>
    %107 = vector.multi_reduction <maximumf>, %106, %cst_36 [1] : vector<16x16xf32> to vector<16xf32>
    %108 = vector.shape_cast %107 : vector<16xf32> to vector<16x1xf32>
    %109 = vector.broadcast %108 : vector<16x1xf32> to vector<16x16xf32>
    %110 = arith.subf %106, %109 : vector<16x16xf32>
    %111 = math.exp %110 : vector<16x16xf32>
    %cst_37 = arith.constant dense<0.000000e+00> : vector<16xf32>
    %112 = vector.multi_reduction <add>, %111, %cst_37 [1] : vector<16x16xf32> to vector<16xf32>
    %113 = vector.shape_cast %112 : vector<16xf32> to vector<16x1xf32>
    %cst_38 = arith.constant 1.000000e-30 : f32
    %114 = vector.broadcast %cst_38 : f32 to vector<16x1xf32>
    %115 = arith.maximumf %113, %114 : vector<16x1xf32>
    %116 = tpu.reciprocal %115 {approx = true} : vector<16x1xf32> -> vector<16x1xf32>
    %117 = vector.broadcast %116 : vector<16x1xf32> to vector<16x16xf32>
    %118 = arith.mulf %111, %117 : vector<16x16xf32>
    %119 = arith.truncf %118 : vector<16x16xf32> to vector<16x16xbf16>
    %120 = vector.extract_strided_slice %45 {offsets = [0, 96], sizes = [16, 32], strides = [1, 1]} : vector<16x128xbf16> to vector<16x32xbf16>
    %cst_39 = arith.constant dense<0.000000e+00> : vector<16x32xf32>
    %121 = tpu.matmul %119, %120, %cst_39 {dimension_numbers = #tpu.dot_dimension_numbers<[1], [0], [0], [1], [0, 0, 1, 1], [], []>} : vector<16x16xbf16>, vector<16x32xbf16>, vector<16x32xf32> -> vector<16x32xf32>
    %122 = tpu.concatenate %64, %83, %102, %121 in 1 : vector<16x32xf32>, vector<16x32xf32>, vector<16x32xf32>, vector<16x32xf32> -> vector<16x128xf32>
    %123 = arith.truncf %122 : vector<16x128xf32> to vector<16x128xbf16>
    %c0_40 = arith.constant 0 : index
    %c0_41 = arith.constant 0 : index
    %124 = vector.load %arg7[%c0_40, %c0_41] : memref<128x128xbf16, #tpu.memory_space<vmem>>, vector<128x128xbf16>
    %cst_42 = arith.constant dense<0.000000e+00> : vector<16x128xf32>
    %125 = tpu.matmul %123, %124, %cst_42 {dimension_numbers = #tpu.dot_dimension_numbers<[1], [0], [0], [1], [0, 0, 1, 1], [], []>} : vector<16x128xbf16>, vector<128x128xbf16>, vector<16x128xf32> -> vector<16x128xf32>
    %c0_43 = arith.constant 0 : index
    %c0_44 = arith.constant 0 : index
    %126 = vector.load %arg8[%c0_43, %c0_44] : memref<1x128xf32, #tpu.memory_space<vmem>>, vector<1x128xf32>
    %127 = vector.broadcast %126 : vector<1x128xf32> to vector<16x128xf32>
    %128 = arith.addf %125, %127 : vector<16x128xf32>
    %129 = arith.addf %35, %128 : vector<16x128xf32>
    %c0_45 = arith.constant 0 : index
    %c0_46 = arith.constant 0 : index
    %130 = vector.load %arg9[%c0_45, %c0_46] : memref<1x128xf32, #tpu.memory_space<vmem>>, vector<1x128xf32>
    %c0_47 = arith.constant 0 : index
    %c0_48 = arith.constant 0 : index
    %131 = vector.load %arg10[%c0_47, %c0_48] : memref<1x128xf32, #tpu.memory_space<vmem>>, vector<1x128xf32>
    %cst_49 = arith.constant dense<0.000000e+00> : vector<16xf32>
    %132 = vector.multi_reduction <add>, %129, %cst_49 [1] : vector<16x128xf32> to vector<16xf32>
    %133 = vector.shape_cast %132 : vector<16xf32> to vector<16x1xf32>
    %cst_50 = arith.constant 1.280000e+02 : f32
    %134 = vector.broadcast %cst_50 : f32 to vector<16x1xf32>
    %135 = arith.divf %133, %134 : vector<16x1xf32>
    %136 = vector.broadcast %135 : vector<16x1xf32> to vector<16x128xf32>
    %137 = arith.subf %129, %136 : vector<16x128xf32>
    %138 = arith.mulf %137, %137 : vector<16x128xf32>
    %cst_51 = arith.constant dense<0.000000e+00> : vector<16xf32>
    %139 = vector.multi_reduction <add>, %138, %cst_51 [1] : vector<16x128xf32> to vector<16xf32>
    %140 = vector.shape_cast %139 : vector<16xf32> to vector<16x1xf32>
    %cst_52 = arith.constant 1.280000e+02 : f32
    %141 = vector.broadcast %cst_52 : f32 to vector<16x1xf32>
    %142 = arith.divf %140, %141 : vector<16x1xf32>
    %143 = vector.broadcast %135 : vector<16x1xf32> to vector<16x128xf32>
    %144 = arith.subf %129, %143 : vector<16x128xf32>
    %cst_53 = arith.constant 9.99999974E-6 : f32
    %145 = vector.broadcast %cst_53 : f32 to vector<16x1xf32>
    %146 = arith.addf %142, %145 : vector<16x1xf32>
    %147 = math.rsqrt %146 : vector<16x1xf32>
    %148 = vector.broadcast %147 : vector<16x1xf32> to vector<16x128xf32>
    %149 = arith.mulf %144, %148 : vector<16x128xf32>
    %150 = vector.broadcast %130 : vector<1x128xf32> to vector<16x128xf32>
    %151 = arith.mulf %149, %150 : vector<16x128xf32>
    %152 = vector.broadcast %131 : vector<1x128xf32> to vector<16x128xf32>
    %153 = arith.addf %151, %152 : vector<16x128xf32>
    %154 = arith.truncf %153 : vector<16x128xf32> to vector<16x128xbf16>
    %c0_54 = arith.constant 0 : index
    %c0_55 = arith.constant 0 : index
    %155 = vector.load %arg11[%c0_54, %c0_55] : memref<128x512xbf16, #tpu.memory_space<vmem>>, vector<128x512xbf16>
    %cst_56 = arith.constant dense<0.000000e+00> : vector<16x512xf32>
    %156 = tpu.matmul %154, %155, %cst_56 {dimension_numbers = #tpu.dot_dimension_numbers<[1], [0], [0], [1], [0, 0, 1, 1], [], []>} : vector<16x128xbf16>, vector<128x512xbf16>, vector<16x512xf32> -> vector<16x512xf32>
    %c0_57 = arith.constant 0 : index
    %c0_58 = arith.constant 0 : index
    %157 = vector.load %arg12[%c0_57, %c0_58] : memref<1x512xf32, #tpu.memory_space<vmem>>, vector<1x512xf32>
    %158 = vector.broadcast %157 : vector<1x512xf32> to vector<16x512xf32>
    %159 = arith.addf %156, %158 : vector<16x512xf32>
    %cst_59 = arith.constant 0.000000e+00 : f32
    %160 = vector.broadcast %cst_59 : f32 to vector<16x512xf32>
    %161 = arith.maximumf %159, %160 : vector<16x512xf32>
    %162 = arith.truncf %161 : vector<16x512xf32> to vector<16x512xbf16>
    %c0_60 = arith.constant 0 : index
    %c0_61 = arith.constant 0 : index
    %163 = vector.load %arg13[%c0_60, %c0_61] : memref<512x128xbf16, #tpu.memory_space<vmem>>, vector<512x128xbf16>
    %cst_62 = arith.constant dense<0.000000e+00> : vector<16x128xf32>
    %164 = tpu.matmul %162, %163, %cst_62 {dimension_numbers = #tpu.dot_dimension_numbers<[1], [0], [0], [1], [0, 0, 1, 1], [], []>} : vector<16x512xbf16>, vector<512x128xbf16>, vector<16x128xf32> -> vector<16x128xf32>
    %c0_63 = arith.constant 0 : index
    %c0_64 = arith.constant 0 : index
    %165 = vector.load %arg14[%c0_63, %c0_64] : memref<1x128xf32, #tpu.memory_space<vmem>>, vector<1x128xf32>
    %166 = vector.broadcast %165 : vector<1x128xf32> to vector<16x128xf32>
    %167 = arith.addf %164, %166 : vector<16x128xf32>
    %168 = arith.addf %153, %167 : vector<16x128xf32>
    %c0_65 = arith.constant 0 : index
    %c0_66 = arith.constant 0 : index
    %c0_67 = arith.constant 0 : index
    %169 = vector.load %arg15[%c0_65, %c0_66, %c0_67] : memref<1x16x128xf32, #tpu.memory_space<vmem>>, vector<1x16x128xf32>
    %170 = vector.shape_cast %169 : vector<1x16x128xf32> to vector<16x128xf32>
    %171 = vector.shape_cast %168 : vector<16x128xf32> to vector<1x16x128xf32>
    tpu.vector_store %arg15[%c0_65, %c0_66, %c0_67], %171 {strides = array<i32>} : memref<1x16x128xf32, #tpu.memory_space<vmem>>, vector<1x16x128xf32>,
    return
  }
  func.func @transform_0(%arg0: i32) -> (i32, i32, i32) {
    %c0_i32 = arith.constant 0 : i32
    %c0_i32_0 = arith.constant 0 : i32
    %c0_i32_1 = arith.constant 0 : i32
    return %arg0, %c0_i32, %c0_i32_0 : i32, i32, i32
  }
  func.func @transform_1(%arg0: i32) -> (i32, i32, i32) {
    %c0_i32 = arith.constant 0 : i32
    %c0_i32_0 = arith.constant 0 : i32
    %c0_i32_1 = arith.constant 0 : i32
    return %arg0, %c0_i32, %c0_i32_0 : i32, i32, i32
  }
  func.func @transform_2(%arg0: i32) -> (i32, i32) {
    %c0_i32 = arith.constant 0 : i32
    %c0_i32_0 = arith.constant 0 : i32
    %c0_i32_1 = arith.constant 0 : i32
    return %c0_i32, %c0_i32_0 : i32, i32
  }
  func.func @transform_3(%arg0: i32) -> (i32, i32) {
    %c0_i32 = arith.constant 0 : i32
    %c0_i32_0 = arith.constant 0 : i32
    %c0_i32_1 = arith.constant 0 : i32
    return %c0_i32, %c0_i32_0 : i32, i32
  }
  func.func @transform_4(%arg0: i32) -> (i32, i32) {
    %c0_i32 = arith.constant 0 : i32
    %c0_i32_0 = arith.constant 0 : i32
    %c0_i32_1 = arith.constant 0 : i32
    return %c0_i32, %c0_i32_0 : i32, i32
  }
  func.func @transform_5(%arg0: i32) -> (i32, i32) {
    %c0_i32 = arith.constant 0 : i32
    %c0_i32_0 = arith.constant 0 : i32
    %c0_i32_1 = arith.constant 0 : i32
    return %c0_i32, %c0_i32_0 : i32, i32
  }
  func.func @transform_6(%arg0: i32) -> (i32, i32) {
    %c0_i32 = arith.constant 0 : i32
    %c0_i32_0 = arith.constant 0 : i32
    %c0_i32_1 = arith.constant 0 : i32
    return %c0_i32, %c0_i32_0 : i32, i32
  }
  func.func @transform_7(%arg0: i32) -> (i32, i32) {
    %c0_i32 = arith.constant 0 : i32
    %c0_i32_0 = arith.constant 0 : i32
    %c0_i32_1 = arith.constant 0 : i32
    return %c0_i32, %c0_i32_0 : i32, i32
  }
  func.func @transform_8(%arg0: i32) -> (i32, i32) {
    %c0_i32 = arith.constant 0 : i32
    %c0_i32_0 = arith.constant 0 : i32
    %c0_i32_1 = arith.constant 0 : i32
    return %c0_i32, %c0_i32_0 : i32, i32
  }
  func.func @transform_9(%arg0: i32) -> (i32, i32) {
    %c0_i32 = arith.constant 0 : i32
    %c0_i32_0 = arith.constant 0 : i32
    %c0_i32_1 = arith.constant 0 : i32
    return %c0_i32, %c0_i32_0 : i32, i32
  }
  func.func @transform_10(%arg0: i32) -> (i32, i32) {
    %c0_i32 = arith.constant 0 : i32
    %c0_i32_0 = arith.constant 0 : i32
    %c0_i32_1 = arith.constant 0 : i32
    return %c0_i32, %c0_i32_0 : i32, i32
  }
  func.func @transform_11(%arg0: i32) -> (i32, i32) {
    %c0_i32 = arith.constant 0 : i32
    %c0_i32_0 = arith.constant 0 : i32
    %c0_i32_1 = arith.constant 0 : i32
    return %c0_i32, %c0_i32_0 : i32, i32
  }
  func.func @transform_12(%arg0: i32) -> (i32, i32) {
    %c0_i32 = arith.constant 0 : i32
    %c0_i32_0 = arith.constant 0 : i32
    %c0_i32_1 = arith.constant 0 : i32
    return %c0_i32, %c0_i32_0 : i32, i32
  }
  func.func @transform_13(%arg0: i32) -> (i32, i32) {
    %c0_i32 = arith.constant 0 : i32
    %c0_i32_0 = arith.constant 0 : i32
    %c0_i32_1 = arith.constant 0 : i32
    return %c0_i32, %c0_i32_0 : i32, i32
  }
  func.func @transform_14(%arg0: i32) -> (i32, i32, i32) {
    %c0_i32 = arith.constant 0 : i32
    %c0_i32_0 = arith.constant 0 : i32
    %c0_i32_1 = arith.constant 0 : i32
    return %arg0, %c0_i32, %c0_i32_0 : i32, i32, i32
  }
}

</mosaic_0001>

<llo_original>
// kernel: tpu_custom_call.1
$region0: #{tpu_custom_call.1}
  #allocation0 [shape = 'u32[]', space=smem, size = 0x4, offset = 0x4, fixed_abs, tag = 'smem constant byte address 0x4 - core index']
  #allocation1 [shape = 'u32[144,128]{1,0:T(1,128)}', space=vmem, size = 0x12000, scoped, tag = 'internal scratch']
  %s0 = inlined_call_operand.hbm [shape: f32[2,16,128], index: 0, kind: input, shape index: {}]
  %s1 = inlined_call_operand.hbm [shape: f32[2,1,16], index: 1, kind: input, shape index: {}]
  %s2 = inlined_call_operand.hbm [shape: f32[1,128], index: 2, kind: input, shape index: {}]
  %s3 = inlined_call_operand.hbm [shape: f32[1,128], index: 3, kind: input, shape index: {}]
  %s4 = inlined_call_operand.hbm [shape: bf16[128,384], index: 4, kind: input, shape index: {}]
  %s5 = inlined_call_operand.vmem [shape: f32[1,384], index: 5, kind: input, shape index: {}]
  %s6 = inlined_call_operand.hbm [shape: bf16[128,128], index: 6, kind: input, shape index: {}]
  %s7 = inlined_call_operand.vmem [shape: f32[1,128], index: 7, kind: input, shape index: {}]
  %s8 = inlined_call_operand.vmem [shape: f32[1,128], index: 8, kind: input, shape index: {}]
  %s9 = inlined_call_operand.vmem [shape: f32[1,128], index: 9, kind: input, shape index: {}]
  %s10 = inlined_call_operand.hbm [shape: bf16[128,512], index: 10, kind: input, shape index: {}]
  %s11 = inlined_call_operand.vmem [shape: f32[1,512], index: 11, kind: input, shape index: {}]
  %s12 = inlined_call_operand.hbm [shape: bf16[512,128], index: 12, kind: input, shape index: {}]
  %s13 = inlined_call_operand.vmem [shape: f32[1,128], index: 13, kind: input, shape index: {}]
  %s14 = inlined_call_operand.hbm [shape: f32[2,16,128], index: 14, kind: output, shape index: {}]
  %s15 = sld [smem:[#allocation0]]
  $region121: #{tpu_custom_call.1} parent=0
    _
  %s17 = ssub.s32 1, %s15
  %s18 = scalar_select 0, %s17, %s15
  $region1: #{tpu_custom_call.1} parent=0
    #allocation2 [shape = 'u8[16384]{0}', space=vmem, size = 0x4000, scoped, tag = 'input window, operand 0']
    #allocation3 [shape = 's32[2]{0}', space=sflag, size = 0x8, scoped, tag = 'scoped memory for tpu_custom_call.1']
    #allocation4 [shape = 's32[2]{0}', space=sflag, size = 0x8, scoped, tag = 'scoped memory for tpu_custom_call.1']
    #allocation5 [shape = 'u8[1024]{0}', space=vmem, size = 0x400, scoped, tag = 'input window, operand 1']
    #allocation6 [shape = 's32[2]{0}', space=sflag, size = 0x8, scoped, tag = 'scoped memory for tpu_custom_call.1']
    #allocation7 [shape = 'u8[512]{0}', space=vmem, size = 0x400, scoped, tag = 'input window, operand 2, single buffered']
    #allocation8 [shape = 'u8[512]{0}', space=vmem, size = 0x400, scoped, tag = 'input window, operand 3, single buffered']
    #allocation9 [shape = 's32[1]{0}', space=sflag, size = 0x4, scoped, tag = 'scoped memory for tpu_custom_call.1']
    #allocation10 [shape = 'u8[98304]{0}', space=vmem, size = 0x18000, scoped, tag = 'input window, operand 4, single buffered']
    #allocation11 [shape = 'u8[32768]{0}', space=vmem, size = 0x8000, scoped, tag = 'input window, operand 6, single buffered']
    #allocation12 [shape = 's32[1]{0}', space=sflag, size = 0x4, scoped, tag = 'scoped memory for tpu_custom_call.1']
    #allocation13 [shape = 'u8[131072]{0}', space=vmem, size = 0x20000, scoped, tag = 'input window, operand 10, single buffered']
    #allocation14 [shape = 'u8[131072]{0}', space=vmem, size = 0x20000, scoped, tag = 'input window, operand 12, single buffered']
    #allocation15 [shape = 's32[1]{0}', space=sflag, size = 0x4, scoped, tag = 'scoped memory for tpu_custom_call.1']
    #allocation16 [shape = 'u8[16384]{0}', space=vmem, size = 0x4000, scoped, tag = 'output window, operand 0']
    %19 = vsyncpa [#allocation3], 0
    %s20 = scalar_lea.sflag [#allocation3], 1
    %21 = vsyncpa %s20, 0
    %22 = vsyncpa [#allocation6], 0
    %s23 = scalar_lea.sflag [#allocation6], 1
    %24 = vsyncpa %s23, 0
    %25 = vsyncpa [#allocation9], 0
    %26 = vsyncpa [#allocation12], 0
    %27 = vsyncpa [#allocation15], 0
    %28 = vsyncpa [#allocation4], 0
    %s29 = scalar_lea.sflag [#allocation4], 1
    %30 = vsyncpa %s29, 0
    loop: start=0, step=1, limit=4
    $region2: #{tpu_custom_call.1} parent=1 // loop_pre_header
      _
    $region3: #{tpu_custom_call.1} parent=1 // loop_header
      %s32 = sphi 0, %s36
      %p33 = scmp.ge.s32.totalorder %s32, 4
      %s42 = sphi 0, %s44
      %s45 = sphi 0, %s42
      %s46 = sphi 0, %s45
      %s62 = sphi 0, %s46
      %s68 = sphi 0, %s70
      %s71 = sphi 0, %s68
      %s72 = sphi 0, %s71
      %s88 = sphi 0, %s72
      %s92 = sphi 0, %s92
      %s94 = sphi 0, %s92
      %s95 = sphi 0, %s94
      %s109 = sphi 0, %s95
      %s113 = sphi 0, %s113
      %s115 = sphi 0, %s113
      %s116 = sphi 0, %s115
      %s130 = sphi 0, %s116
      %s134 = sphi 0, %s134
      %s136 = sphi 0, %s134
      %s137 = sphi 0, %s136
      %s151 = sphi 0, %s137
      %s155 = sphi 0, %s155
      %s157 = sphi 0, %s155
      %s158 = sphi 0, %s157
      %s172 = sphi 0, %s158
      %s176 = sphi 0, %s176
      %s178 = sphi 0, %s176
      %s179 = sphi 0, %s178
      %s193 = sphi 0, %s179
      %s197 = sphi 0, %s197
      %s199 = sphi 0, %s197
      %s200 = sphi 0, %s199
      %s214 = sphi 0, %s200
      %s218 = sphi 0, %s218
      %s220 = sphi 0, %s218
      %s221 = sphi 0, %s220
      %s235 = sphi 0, %s221
      %s239 = sphi 0, %s239
      %s241 = sphi 0, %s239
      %s242 = sphi 0, %s241
      %s256 = sphi 0, %s242
      %s260 = sphi 0, %s260
      %s262 = sphi 0, %s260
      %s263 = sphi 0, %s262
      %s277 = sphi 0, %s263
      %s281 = sphi 0, %s281
      %s283 = sphi 0, %s281
      %s284 = sphi 0, %s283
      %s298 = sphi 0, %s284
      %s302 = sphi 0, %s302
      %s304 = sphi 0, %s302
      %s305 = sphi 0, %s304
      %s319 = sphi 0, %s305
      %s323 = sphi 0, %s323
      %s325 = sphi 0, %s323
      %s326 = sphi 0, %s325
      %s340 = sphi 0, %s326
      %s346 = sphi 0, %s348
      %s349 = sphi 0, %s346
      %s350 = sphi 0, %s349
      %s366 = sphi 0, %s350
    $region4: #{tpu_custom_call.1} parent=1 // loop_header_branch
      %35 = sbr.rel (%p33) target = $region8
    $region5: #{tpu_custom_call.1} parent=1 // loop_body
      %s37 = ssub.s32 %s32, 1
      %s38 = ssub.s32 %s32, 2
      %s39 = sadd.s32 %s32, 1
      %s40 = ssub.s32 %s32, %s39
      %p41 = scmp.eq.s32.totalorder %s40, 0
      %s43 = sadd.s32 %s42, 1
      %s44 = scalar_select %p41, %s42, %s43
      %p47 = pneg %p41
      %p48 = scmp.eq.s32.totalorder %s32, 1
      %p49 = por %p47, %p48
      %p50 = scmp.ne.s32.totalorder %s42, %s45
      %p51 = scmp.eq.s32.totalorder %s32, 0
      %p52 = por %p50, %p51
      %p53 = scmp.ne.s32.totalorder %s42, %s45
      %p54 = scmp.eq.s32.totalorder %s37, 1
      %p55 = por %p53, %p54
      %p56 = scmp.ne.s32.totalorder %s45, %s46
      %p57 = scmp.eq.s32.totalorder %s37, 0
      %p58 = por %p56, %p57
      %p59 = scmp.ne.s32.totalorder %s45, %s46
      %p60 = scmp.eq.s32.totalorder %s38, 1
      %p61 = por %p59, %p60
      %p63 = scmp.ne.s32.totalorder %s46, %s62
      %p64 = scmp.eq.s32.totalorder %s38, 0
      %p65 = por %p63, %p64
      %s66 = ssub.s32 %s32, %s39
      %p67 = scmp.eq.s32.totalorder %s66, 0
      %s69 = sadd.s32 %s68, 1
      %s70 = scalar_select %p67, %s68, %s69
      %p73 = pneg %p67
      %p74 = scmp.eq.s32.totalorder %s32, 1
      %p75 = por %p73, %p74
      %p76 = scmp.ne.s32.totalorder %s68, %s71
      %p77 = scmp.eq.s32.totalorder %s32, 0
      %p78 = por %p76, %p77
      %p79 = scmp.ne.s32.totalorder %s68, %s71
      %p80 = scmp.eq.s32.totalorder %s37, 1
      %p81 = por %p79, %p80
      %p82 = scmp.ne.s32.totalorder %s71, %s72
      %p83 = scmp.eq.s32.totalorder %s37, 0
      %p84 = por %p82, %p83
      %p85 = scmp.ne.s32.totalorder %s71, %s72
      %p86 = scmp.eq.s32.totalorder %s38, 1
      %p87 = por %p85, %p86
      %p89 = scmp.ne.s32.totalorder %s72, %s88
      %p90 = scmp.eq.s32.totalorder %s38, 0
      %p91 = por %p89, %p90
      %s93 = sadd.s32 %s92, 1
      %p96 = scmp.eq.s32.totalorder %s32, 1
      %p97 = scmp.ne.s32.totalorder %s92, %s94
      %p98 = scmp.eq.s32.totalorder %s32, 0
      %p99 = por %p97, %p98
      %p100 = scmp.ne.s32.totalorder %s92, %s94
      %p101 = scmp.eq.s32.totalorder %s37, 1
      %p102 = por %p100, %p101
      %p103 = scmp.ne.s32.totalorder %s94, %s95
      %p104 = scmp.eq.s32.totalorder %s37, 0
      %p105 = por %p103, %p104
      %p106 = scmp.ne.s32.totalorder %s94, %s95
      %p107 = scmp.eq.s32.totalorder %s38, 1
      %p108 = por %p106, %p107
      %p110 = scmp.ne.s32.totalorder %s95, %s109
      %p111 = scmp.eq.s32.totalorder %s38, 0
      %p112 = por %p110, %p111
      %s114 = sadd.s32 %s113, 1
      %p117 = scmp.eq.s32.totalorder %s32, 1
      %p118 = scmp.ne.s32.totalorder %s113, %s115
      %p119 = scmp.eq.s32.totalorder %s32, 0
      %p120 = por %p118, %p119
      %p121 = scmp.ne.s32.totalorder %s113, %s115
      %p122 = scmp.eq.s32.totalorder %s37, 1
      %p123 = por %p121, %p122
      %p124 = scmp.ne.s32.totalorder %s115, %s116
      %p125 = scmp.eq.s32.totalorder %s37, 0
      %p126 = por %p124, %p125
      %p127 = scmp.ne.s32.totalorder %s115, %s116
      %p128 = scmp.eq.s32.totalorder %s38, 1
      %p129 = por %p127, %p128
      %p131 = scmp.ne.s32.totalorder %s116, %s130
      %p132 = scmp.eq.s32.totalorder %s38, 0
      %p133 = por %p131, %p132
      %s135 = sadd.s32 %s134, 1
      %p138 = scmp.eq.s32.totalorder %s32, 1
      %p139 = scmp.ne.s32.totalorder %s134, %s136
      %p140 = scmp.eq.s32.totalorder %s32, 0
      %p141 = por %p139, %p140
      %p142 = scmp.ne.s32.totalorder %s134, %s136
      %p143 = scmp.eq.s32.totalorder %s37, 1
      %p144 = por %p142, %p143
      %p145 = scmp.ne.s32.totalorder %s136, %s137
      %p146 = scmp.eq.s32.totalorder %s37, 0
      %p147 = por %p145, %p146
      %p148 = scmp.ne.s32.totalorder %s136, %s137
      %p149 = scmp.eq.s32.totalorder %s38, 1
      %p150 = por %p148, %p149
      %p152 = scmp.ne.s32.totalorder %s137, %s151
      %p153 = scmp.eq.s32.totalorder %s38, 0
      %p154 = por %p152, %p153
      %s156 = sadd.s32 %s155, 1
      %p159 = scmp.eq.s32.totalorder %s32, 1
      %p160 = scmp.ne.s32.totalorder %s155, %s157
      %p161 = scmp.eq.s32.totalorder %s32, 0
      %p162 = por %p160, %p161
      %p163 = scmp.ne.s32.totalorder %s155, %s157
      %p164 = scmp.eq.s32.totalorder %s37, 1
      %p165 = por %p163, %p164
      %p166 = scmp.ne.s32.totalorder %s157, %s158
      %p167 = scmp.eq.s32.totalorder %s37, 0
      %p168 = por %p166, %p167
      %p169 = scmp.ne.s32.totalorder %s157, %s158
      %p170 = scmp.eq.s32.totalorder %s38, 1
      %p171 = por %p169, %p170
      %p173 = scmp.ne.s32.totalorder %s158, %s172
      %p174 = scmp.eq.s32.totalorder %s38, 0
      %p175 = por %p173, %p174
      %s177 = sadd.s32 %s176, 1
      %p180 = scmp.eq.s32.totalorder %s32, 1
      %p181 = scmp.ne.s32.totalorder %s176, %s178
      %p182 = scmp.eq.s32.totalorder %s32, 0
      %p183 = por %p181, %p182
      %p184 = scmp.ne.s32.totalorder %s176, %s178
      %p185 = scmp.eq.s32.totalorder %s37, 1
      %p186 = por %p184, %p185
      %p187 = scmp.ne.s32.totalorder %s178, %s179
      %p188 = scmp.eq.s32.totalorder %s37, 0
      %p189 = por %p187, %p188
      %p190 = scmp.ne.s32.totalorder %s178, %s179
      %p191 = scmp.eq.s32.totalorder %s38, 1
      %p192 = por %p190, %p191
      %p194 = scmp.ne.s32.totalorder %s179, %s193
      %p195 = scmp.eq.s32.totalorder %s38, 0
      %p196 = por %p194, %p195
      %s198 = sadd.s32 %s197, 1
      %p201 = scmp.eq.s32.totalorder %s32, 1
      %p202 = scmp.ne.s32.totalorder %s197, %s199
      %p203 = scmp.eq.s32.totalorder %s32, 0
      %p204 = por %p202, %p203
      %p205 = scmp.ne.s32.totalorder %s197, %s199
      %p206 = scmp.eq.s32.totalorder %s37, 1
      %p207 = por %p205, %p206
      %p208 = scmp.ne.s32.totalorder %s199, %s200
      %p209 = scmp.eq.s32.totalorder %s37, 0
      %p210 = por %p208, %p209
      %p211 = scmp.ne.s32.totalorder %s199, %s200
      %p212 = scmp.eq.s32.totalorder %s38, 1
      %p213 = por %p211, %p212
      %p215 = scmp.ne.s32.totalorder %s200, %s214
      %p216 = scmp.eq.s32.totalorder %s38, 0
      %p217 = por %p215, %p216
      %s219 = sadd.s32 %s218, 1
      %p222 = scmp.eq.s32.totalorder %s32, 1
      %p223 = scmp.ne.s32.totalorder %s218, %s220
      %p224 = scmp.eq.s32.totalorder %s32, 0
      %p225 = por %p223, %p224
      %p226 = scmp.ne.s32.totalorder %s218, %s220
      %p227 = scmp.eq.s32.totalorder %s37, 1
      %p228 = por %p226, %p227
      %p229 = scmp.ne.s32.totalorder %s220, %s221
      %p230 = scmp.eq.s32.totalorder %s37, 0
      %p231 = por %p229, %p230
      %p232 = scmp.ne.s32.totalorder %s220, %s221
      %p233 = scmp.eq.s32.totalorder %s38, 1
      %p234 = por %p232, %p233
      %p236 = scmp.ne.s32.totalorder %s221, %s235
      %p237 = scmp.eq.s32.totalorder %s38, 0
      %p238 = por %p236, %p237
      %s240 = sadd.s32 %s239, 1
      %p243 = scmp.eq.s32.totalorder %s32, 1
      %p244 = scmp.ne.s32.totalorder %s239, %s241
      %p245 = scmp.eq.s32.totalorder %s32, 0
      %p246 = por %p244, %p245
      %p247 = scmp.ne.s32.totalorder %s239, %s241
      %p248 = scmp.eq.s32.totalorder %s37, 1
      %p249 = por %p247, %p248
      %p250 = scmp.ne.s32.totalorder %s241, %s242
      %p251 = scmp.eq.s32.totalorder %s37, 0
      %p252 = por %p250, %p251
      %p253 = scmp.ne.s32.totalorder %s241, %s242
      %p254 = scmp.eq.s32.totalorder %s38, 1
      %p255 = por %p253, %p254
      %p257 = scmp.ne.s32.totalorder %s242, %s256
      %p258 = scmp.eq.s32.totalorder %s38, 0
      %p259 = por %p257, %p258
      %s261 = sadd.s32 %s260, 1
      %p264 = scmp.eq.s32.totalorder %s32, 1
      %p265 = scmp.ne.s32.totalorder %s260, %s262
      %p266 = scmp.eq.s32.totalorder %s32, 0
      %p267 = por %p265, %p266
      %p268 = scmp.ne.s32.totalorder %s260, %s262
      %p269 = scmp.eq.s32.totalorder %s37, 1
      %p270 = por %p268, %p269
      %p271 = scmp.ne.s32.totalorder %s262, %s263
      %p272 = scmp.eq.s32.totalorder %s37, 0
      %p273 = por %p271, %p272
      %p274 = scmp.ne.s32.totalorder %s262, %s263
      %p275 = scmp.eq.s32.totalorder %s38, 1
      %p276 = por %p274, %p275
      %p278 = scmp.ne.s32.totalorder %s263, %s277
      %p279 = scmp.eq.s32.totalorder %s38, 0
      %p280 = por %p278, %p279
      %s282 = sadd.s32 %s281, 1
      %p285 = scmp.eq.s32.totalorder %s32, 1
      %p286 = scmp.ne.s32.totalorder %s281, %s283
      %p287 = scmp.eq.s32.totalorder %s32, 0
      %p288 = por %p286, %p287
      %p289 = scmp.ne.s32.totalorder %s281, %s283
      %p290 = scmp.eq.s32.totalorder %s37, 1
      %p291 = por %p289, %p290
      %p292 = scmp.ne.s32.totalorder %s283, %s284
      %p293 = scmp.eq.s32.totalorder %s37, 0
      %p294 = por %p292, %p293
      %p295 = scmp.ne.s32.totalorder %s283, %s284
      %p296 = scmp.eq.s32.totalorder %s38, 1
      %p297 = por %p295, %p296
      %p299 = scmp.ne.s32.totalorder %s284, %s298
      %p300 = scmp.eq.s32.totalorder %s38, 0
      %p301 = por %p299, %p300
      %s303 = sadd.s32 %s302, 1
      %p306 = scmp.eq.s32.totalorder %s32, 1
      %p307 = scmp.ne.s32.totalorder %s302, %s304
      %p308 = scmp.eq.s32.totalorder %s32, 0
      %p309 = por %p307, %p308
      %p310 = scmp.ne.s32.totalorder %s302, %s304
      %p311 = scmp.eq.s32.totalorder %s37, 1
      %p312 = por %p310, %p311
      %p313 = scmp.ne.s32.totalorder %s304, %s305
      %p314 = scmp.eq.s32.totalorder %s37, 0
      %p315 = por %p313, %p314
      %p316 = scmp.ne.s32.totalorder %s304, %s305
      %p317 = scmp.eq.s32.totalorder %s38, 1
      %p318 = por %p316, %p317
      %p320 = scmp.ne.s32.totalorder %s305, %s319
      %p321 = scmp.eq.s32.totalorder %s38, 0
      %p322 = por %p320, %p321
      %s324 = sadd.s32 %s323, 1
      %p327 = scmp.eq.s32.totalorder %s32, 1
      %p328 = scmp.ne.s32.totalorder %s323, %s325
      %p329 = scmp.eq.s32.totalorder %s32, 0
      %p330 = por %p328, %p329
      %p331 = scmp.ne.s32.totalorder %s323, %s325
      %p332 = scmp.eq.s32.totalorder %s37, 1
      %p333 = por %p331, %p332
      %p334 = scmp.ne.s32.totalorder %s325, %s326
      %p335 = scmp.eq.s32.totalorder %s37, 0
      %p336 = por %p334, %p335
      %p337 = scmp.ne.s32.totalorder %s325, %s326
      %p338 = scmp.eq.s32.totalorder %s38, 1
      %p339 = por %p337, %p338
      %p341 = scmp.ne.s32.totalorder %s326, %s340
      %p342 = scmp.eq.s32.totalorder %s38, 0
      %p343 = por %p341, %p342
      %s344 = ssub.s32 %s32, %s39
      %p345 = scmp.eq.s32.totalorder %s344, 0
      %s347 = sadd.s32 %s346, 1
      %s348 = scalar_select %p345, %s346, %s347
      %p351 = pneg %p345
      %p352 = scmp.eq.s32.totalorder %s32, 1
      %p353 = por %p351, %p352
      %p354 = scmp.ne.s32.totalorder %s346, %s349
      %p355 = scmp.eq.s32.totalorder %s32, 0
      %p356 = por %p354, %p355
      %p357 = scmp.ne.s32.totalorder %s346, %s349
      %p358 = scmp.eq.s32.totalorder %s37, 1
      %p359 = por %p357, %p358
      %p360 = scmp.ne.s32.totalorder %s349, %s350
      %p361 = scmp.eq.s32.totalorder %s37, 0
      %p362 = por %p360, %p361
      %p363 = scmp.ne.s32.totalorder %s349, %s350
      %p364 = scmp.eq.s32.totalorder %s38, 1
      %p365 = por %p363, %p364
      %p367 = scmp.ne.s32.totalorder %s350, %s366
      %p368 = scmp.eq.s32.totalorder %s38, 0
      %p369 = por %p367, %p368
      %p370 = scmp.le.s32.totalorder 1, %s32
      %p371 = scmp.lt.s32.totalorder %s32, 3
      %p372 = pnand %p370, %p371
      %p373 = pneg %p372
      // Predicated region
      $region9: #{tpu_custom_call.1} parent=5 // pred_check
        _
      $region10: #{tpu_custom_call.1} parent=5 // pred_check_branch
        %375 = sbr.rel (%p372) target = $region12
      $region11: #{tpu_custom_call.1} parent=5 // pred_region
        %s376 = ssub.s32 %s32, 1
        // Predicated region
        $region13: #{tpu_custom_call.1} parent=11 // pred_check
          %p377 = pneg %p105
        $region14: #{tpu_custom_call.1} parent=11 // pred_check_branch
          %379 = sbr.rel (%p377) target = $region16
        $region15: #{tpu_custom_call.1} parent=11 // pred_region
          %s381 = ssub.s32 16, 16
          %382 = vsyncadd [#allocation6], %s381
          %s384 = sshll.u32 [#allocation7], 4
          %s385 = int_to_ptr.vmem [resolvable:$true] %s384
          %387 = dma.hbm_to_vmem [thread:$0]  %s2, 16, %s385, [#allocation6]
        $region16: #{tpu_custom_call.1} parent=11 // pred_fallthru
          _
        // Predicated region
        $region17: #{tpu_custom_call.1} parent=11 // pred_check
          %p388 = pneg %p126
        $region18: #{tpu_custom_call.1} parent=11 // pred_check_branch
          %390 = sbr.rel (%p388) target = $region20
        $region19: #{tpu_custom_call.1} parent=11 // pred_region
          %s392 = ssub.s32 16, 16
          %393 = vsyncadd [#allocation9], %s392
          %s395 = sshll.u32 [#allocation8], 4
          %s396 = int_to_ptr.vmem [resolvable:$true] %s395
          %398 = dma.hbm_to_vmem [thread:$0]  %s3, 16, %s396, [#allocation9]
        $region20: #{tpu_custom_call.1} parent=11 // pred_fallthru
          _
        // Predicated region
        $region21: #{tpu_custom_call.1} parent=11 // pred_check
          %p399 = pneg %p147
        $region22: #{tpu_custom_call.1} parent=11 // pred_check_branch
          %401 = sbr.rel (%p399) target = $region24
        $region23: #{tpu_custom_call.1} parent=11 // pred_region
          %s403 = ssub.s32 3072, 3072
          %404 = vsyncadd [#allocation9], %s403
          %s405 = sshll.u32 [#allocation10], 4
          %s406 = int_to_ptr.vmem [resolvable:$true] %s405
          %411 = dma.hbm_to_vmem [thread:$0]  %s4, 3072, %s406, [#allocation9], 192, 192, 12
        $region24: #{tpu_custom_call.1} parent=11 // pred_fallthru
          _
        // Predicated region
        $region25: #{tpu_custom_call.1} parent=11 // pred_check
          %p412 = pneg %p168
        $region26: #{tpu_custom_call.1} parent=11 // pred_check_branch
          %414 = sbr.rel (%p412) target = $region28
        $region27: #{tpu_custom_call.1} parent=11 // pred_region
          _
        $region28: #{tpu_custom_call.1} parent=11 // pred_fallthru
          _
        // Predicated region
        $region29: #{tpu_custom_call.1} parent=11 // pred_check
          %p415 = pneg %p189
        $region30: #{tpu_custom_call.1} parent=11 // pred_check_branch
          %417 = sbr.rel (%p415) target = $region32
        $region31: #{tpu_custom_call.1} parent=11 // pred_region
          %s419 = ssub.s32 1024, 1024
          %420 = vsyncadd [#allocation12], %s419
          %s421 = sshll.u32 [#allocation11], 4
          %s422 = int_to_ptr.vmem [resolvable:$true] %s421
          %427 = dma.hbm_to_vmem [thread:$0]  %s6, 1024, %s422, [#allocation12], 64, 64, 4
        $region32: #{tpu_custom_call.1} parent=11 // pred_fallthru
          _
        // Predicated region
        $region33: #{tpu_custom_call.1} parent=11 // pred_check
          %p428 = pneg %p210
        $region34: #{tpu_custom_call.1} parent=11 // pred_check_branch
          %430 = sbr.rel (%p428) target = $region36
        $region35: #{tpu_custom_call.1} parent=11 // pred_region
          _
        $region36: #{tpu_custom_call.1} parent=11 // pred_fallthru
          _
        // Predicated region
        $region37: #{tpu_custom_call.1} parent=11 // pred_check
          %p431 = pneg %p231
        $region38: #{tpu_custom_call.1} parent=11 // pred_check_branch
          %433 = sbr.rel (%p431) target = $region40
        $region39: #{tpu_custom_call.1} parent=11 // pred_region
          _
        $region40: #{tpu_custom_call.1} parent=11 // pred_fallthru
          _
        // Predicated region
        $region41: #{tpu_custom_call.1} parent=11 // pred_check
          %p434 = pneg %p252
        $region42: #{tpu_custom_call.1} parent=11 // pred_check_branch
          %436 = sbr.rel (%p434) target = $region44
        $region43: #{tpu_custom_call.1} parent=11 // pred_region
          _
        $region44: #{tpu_custom_call.1} parent=11 // pred_fallthru
          _
        // Predicated region
        $region45: #{tpu_custom_call.1} parent=11 // pred_check
          %p437 = pneg %p273
        $region46: #{tpu_custom_call.1} parent=11 // pred_check_branch
          %439 = sbr.rel (%p437) target = $region48
        $region47: #{tpu_custom_call.1} parent=11 // pred_region
          %s441 = ssub.s32 4096, 4096
          %442 = vsyncadd [#allocation12], %s441
          %s443 = sshll.u32 [#allocation13], 4
          %s444 = int_to_ptr.vmem [resolvable:$true] %s443
          %449 = dma.hbm_to_vmem [thread:$0]  %s10, 4096, %s444, [#allocation12], 256, 256, 16
        $region48: #{tpu_custom_call.1} parent=11 // pred_fallthru
          _
        // Predicated region
        $region49: #{tpu_custom_call.1} parent=11 // pred_check
          %p450 = pneg %p294
        $region50: #{tpu_custom_call.1} parent=11 // pred_check_branch
          %452 = sbr.rel (%p450) target = $region52
        $region51: #{tpu_custom_call.1} parent=11 // pred_region
          _
        $region52: #{tpu_custom_call.1} parent=11 // pred_fallthru
          _
        // Predicated region
        $region53: #{tpu_custom_call.1} parent=11 // pred_check
          %p453 = pneg %p315
        $region54: #{tpu_custom_call.1} parent=11 // pred_check_branch
          %455 = sbr.rel (%p453) target = $region56
        $region55: #{tpu_custom_call.1} parent=11 // pred_region
          %s457 = ssub.s32 4096, 4096
          %458 = vsyncadd [#allocation15], %s457
          %s459 = sshll.u32 [#allocation14], 4
          %s460 = int_to_ptr.vmem [resolvable:$true] %s459
          %465 = dma.hbm_to_vmem [thread:$0]  %s12, 4096, %s460, [#allocation15], 64, 64, 4
        $region56: #{tpu_custom_call.1} parent=11 // pred_fallthru
          _
        // Predicated region
        $region57: #{tpu_custom_call.1} parent=11 // pred_check
          %p466 = pneg %p336
        $region58: #{tpu_custom_call.1} parent=11 // pred_check_branch
          %468 = sbr.rel (%p466) target = $region60
        $region59: #{tpu_custom_call.1} parent=11 // pred_region
          _
        $region60: #{tpu_custom_call.1} parent=11 // pred_fallthru
          _
      $region12: #{tpu_custom_call.1} parent=5 // pred_fallthru
        _
      %p469 = scmp.lt.s32.totalorder %s32, 2
      // Predicated region
      $region61: #{tpu_custom_call.1} parent=5 // pred_check
        %p470 = pneg %p469
      $region62: #{tpu_custom_call.1} parent=5 // pred_check_branch
        %472 = sbr.rel (%p470) target = $region64
      $region63: #{tpu_custom_call.1} parent=5 // pred_region
        // Predicated region
        $region65: #{tpu_custom_call.1} parent=63 // pred_check
          %p473 = pneg %p52
        $region66: #{tpu_custom_call.1} parent=63 // pred_check_branch
          %475 = sbr.rel (%p473) target = $region68
        $region67: #{tpu_custom_call.1} parent=63 // pred_region
          %s476 = sand.u32 %s42, 1
          %s477 = scalar_lea.sflag [#allocation3], %s476
          %s478 = sand.u32 %s42, 1
          %s479 = smul.addr %s478, 16
          %s480 = scalar_lea.vmem [#allocation2], %s479
          %s482 = ssub.s32 256, 256
          %483 = vsyncadd %s477, %s482
          %s484 = smul.addr %s32, 2
          %s485 = smul.addr %s484, 128
          %s486 = scalar_lea.hbm %s0, %s485
          %s487 = sshll.u32 %s480, 4
          %s488 = int_to_ptr.vmem [resolvable:$true] %s487
          %493 = dma.hbm_to_vmem [thread:$0]  %s486, 256, %s488, %s477, 128, 128, 8
        $region68: #{tpu_custom_call.1} parent=63 // pred_fallthru
          _
        // Predicated region
        $region69: #{tpu_custom_call.1} parent=63 // pred_check
          %p494 = pneg %p78
        $region70: #{tpu_custom_call.1} parent=63 // pred_check_branch
          %496 = sbr.rel (%p494) target = $region72
        $region71: #{tpu_custom_call.1} parent=63 // pred_region
          %s497 = sand.u32 %s32, 1
          %s498 = scalar_lea.sflag [#allocation6], %s497
          %s499 = sand.u32 %s68, 1
          %s500 = scalar_lea.vmem [#allocation5], %s499
          %s502 = ssub.s32 16, 16
          %503 = vsyncadd %s498, %s502
          %s504 = smul.addr %s32, 16
          %s505 = scalar_lea.hbm %s1, %s504
          %s507 = sshll.u32 %s500, 4
          %s508 = int_to_ptr.vmem [resolvable:$true] %s507
          %510 = dma.hbm_to_vmem [thread:$0]  %s505, 16, %s508, %s498
        $region72: #{tpu_custom_call.1} parent=63 // pred_fallthru
          _
      $region64: #{tpu_custom_call.1} parent=5 // pred_fallthru
        _
      %p511 = scmp.le.s32.totalorder 1, %s32
      %p512 = scmp.lt.s32.totalorder %s32, 3
      %p513 = pnand %p511, %p512
      %p514 = pneg %p513
      // Predicated region
      $region73: #{tpu_custom_call.1} parent=5 // pred_check
        _
      $region74: #{tpu_custom_call.1} parent=5 // pred_check_branch
        %516 = sbr.rel (%p513) target = $region76
      $region75: #{tpu_custom_call.1} parent=5 // pred_region
        %s517 = ssub.s32 %s32, 1
        %s518 = sand.u32 %s45, 1
        %s519 = scalar_lea.sflag [#allocation3], %s518
        %s520 = sand.u32 %s45, 1
        %s521 = smul.addr %s520, 16
        %s522 = scalar_lea.vmem [#allocation2], %s521
        // Predicated region
        $region77: #{tpu_custom_call.1} parent=75 // pred_check
          %p523 = pneg %p58
        $region78: #{tpu_custom_call.1} parent=75 // pred_check_branch
          %525 = sbr.rel (%p523) target = $region80
        $region79: #{tpu_custom_call.1} parent=75 // pred_region
          %526 = dma.done %s519, 256
        $region80: #{tpu_custom_call.1} parent=75 // pred_fallthru
          _
        %s527 = sand.u32 %s37, 1
        %s528 = scalar_lea.sflag [#allocation6], %s527
        %s529 = sand.u32 %s71, 1
        %s530 = scalar_lea.vmem [#allocation5], %s529
        // Predicated region
        $region81: #{tpu_custom_call.1} parent=75 // pred_check
          %p531 = pneg %p84
        $region82: #{tpu_custom_call.1} parent=75 // pred_check_branch
          %533 = sbr.rel (%p531) target = $region84
        $region83: #{tpu_custom_call.1} parent=75 // pred_region
          %534 = dma.done %s528, 16
        $region84: #{tpu_custom_call.1} parent=75 // pred_fallthru
          _
        // Predicated region
        $region85: #{tpu_custom_call.1} parent=75 // pred_check
          %p535 = pneg %p105
        $region86: #{tpu_custom_call.1} parent=75 // pred_check_branch
          %537 = sbr.rel (%p535) target = $region88
        $region87: #{tpu_custom_call.1} parent=75 // pred_region
          %538 = dma.done [#allocation6], 16
        $region88: #{tpu_custom_call.1} parent=75 // pred_fallthru
          _
        // Predicated region
        $region89: #{tpu_custom_call.1} parent=75 // pred_check
          %p539 = pneg %p126
        $region90: #{tpu_custom_call.1} parent=75 // pred_check_branch
          %541 = sbr.rel (%p539) target = $region92
        $region91: #{tpu_custom_call.1} parent=75 // pred_region
          %542 = dma.done [#allocation9], 16
        $region92: #{tpu_custom_call.1} parent=75 // pred_fallthru
          _
        // Predicated region
        $region93: #{tpu_custom_call.1} parent=75 // pred_check
          %p543 = pneg %p147
        $region94: #{tpu_custom_call.1} parent=75 // pred_check_branch
          %545 = sbr.rel (%p543) target = $region96
        $region95: #{tpu_custom_call.1} parent=75 // pred_region
          %546 = dma.done [#allocation9], 3072
        $region96: #{tpu_custom_call.1} parent=75 // pred_fallthru
          _
        // Predicated region
        $region97: #{tpu_custom_call.1} parent=75 // pred_check
          %p547 = pneg %p189
        $region98: #{tpu_custom_call.1} parent=75 // pred_check_branch
          %549 = sbr.rel (%p547) target = $region100
        $region99: #{tpu_custom_call.1} parent=75 // pred_region
          %550 = dma.done [#allocation12], 1024
        $region100: #{tpu_custom_call.1} parent=75 // pred_fallthru
          _
        // Predicated region
        $region101: #{tpu_custom_call.1} parent=75 // pred_check
          %p551 = pneg %p273
        $region102: #{tpu_custom_call.1} parent=75 // pred_check_branch
          %553 = sbr.rel (%p551) target = $region104
        $region103: #{tpu_custom_call.1} parent=75 // pred_region
          %554 = dma.done [#allocation12], 4096
        $region104: #{tpu_custom_call.1} parent=75 // pred_fallthru
          _
        // Predicated region
        $region105: #{tpu_custom_call.1} parent=75 // pred_check
          %p555 = pneg %p315
        $region106: #{tpu_custom_call.1} parent=75 // pred_check_branch
          %557 = sbr.rel (%p555) target = $region108
        $region107: #{tpu_custom_call.1} parent=75 // pred_region
          %558 = dma.done [#allocation15], 4096
        $region108: #{tpu_custom_call.1} parent=75 // pred_fallthru
          _
        %s559 = sand.u32 %s45, 1
        %s560 = scalar_lea.sflag [#allocation3], %s559
        %s561 = sand.u32 %s45, 1
        %s562 = smul.addr %s561, 16
        %s563 = scalar_lea.vmem [#allocation2], %s562
        %p564 = pneg %p58
        %p565 = pneg %p55
        %s566 = sand.u32 %s37, 1
        %s567 = scalar_lea.sflag [#allocation6], %s566
        %s568 = sand.u32 %s71, 1
        %s569 = scalar_lea.vmem [#allocation5], %s568
        %p570 = pneg %p84
        %p571 = pneg %p81
        %p572 = pneg %p105
        %p573 = pneg %p102
        %p574 = pneg %p126
        %p575 = pneg %p123
        %p576 = pneg %p147
        %p577 = pneg %p144
        %p578 = pneg %p168
        %p579 = pneg %p165
        %p580 = pneg %p189
        %p581 = pneg %p186
        %p582 = pneg %p210
        %p583 = pneg %p207
        %p584 = pneg %p231
        %p585 = pneg %p228
        %p586 = pneg %p252
        %p587 = pneg %p249
        %p588 = pneg %p273
        %p589 = pneg %p270
        %p590 = pneg %p294
        %p591 = pneg %p291
        %p592 = pneg %p315
        %p593 = pneg %p312
        %p594 = pneg %p336
        %p595 = pneg %p333
        %p596 = pneg %p362
        %p597 = pneg %p359
        %s598 = sand.u32 %s349, 1
        %s599 = scalar_lea.sflag [#allocation4], %s598
        %s600 = sand.u32 %s349, 1
        %s601 = smul.addr %s600, 16
        %s602 = scalar_lea.vmem [#allocation16], %s601
        %v604 = vld [vmem:[%s522] sm:$0xff]
        %v605 = vld [vmem:[%s522 + $0x8] sm:$0xff]
        %v606 = vlaneseq
        %v607 = vshrl.u32 %v606, 7
        %v608 = vadd.s32 %v607, 8
        %v609 = vlaneseq
        %v610 = vand.u32 %v609, 127
        %vm611 = vcmp.gt.s32.totalorder %v610, %v607
        %vm612 = vcmp.gt.s32.totalorder %v610, %v608
        %v613 = vsel %vm611, -1e+30, 0.0
        %v614 = vsel %vm612, -1e+30, 0.0
        %v615 = vld [vmem:[%s530] sm:$0x1]
        %v617 = vlaneseq
        %v618 = vshrl.u32 %v617, 7
        %v619 = vsub.s32 0, %v618
        %v620 = vrot.slane %v615, %v619
        %v622 = vadd.f32 %v613, %v620
        %v623 = vadd.f32 %v614, %v620
        %v624 = vld [vmem:[#allocation7] sm:$0x1]
        %v625 = vld [vmem:[#allocation8] sm:$0x1]
        %626 = vadd.xlane.f32.xlu0 %v604
        %v627 = vpop.xlane.xlu0 %626
        %628 = vadd.xlane.f32.xlu0 %v605
        %v629 = vpop.xlane.xlu0 %628
        %v630 = vrcp.pop 128.0
        %v631 = vmul.f32 %v627, %v630
        %v632 = vmul.f32 %v629, %v630
        %v633 = vsub.f32 %v604, %v631
        %v634 = vsub.f32 %v605, %v632
        %v635 = vmul.f32 %v633, %v633
        %v636 = vmul.f32 %v634, %v634
        %637 = vadd.xlane.f32.xlu0 %v635
        %v638 = vpop.xlane.xlu0 %637
        %639 = vadd.xlane.f32.xlu0 %v636
        %v640 = vpop.xlane.xlu0 %639
        %v641 = vmul.f32 %v638, %v630
        %v642 = vmul.f32 %v640, %v630
        %v643 = vadd.f32 %v641, 1e-05
        %v644 = vadd.f32 %v642, 1e-05
        %v645 = vrsqrt.pop %v643
        %v646 = vrsqrt.pop %v644
        %v647 = vmul.f32 %v633, %v645
        %v648 = vmul.f32 %v634, %v646
        %v650 = vlaneseq
        %v651 = vshrl.u32 %v650, 7
        %v652 = vsub.s32 0, %v651
        %v653 = vrot.slane %v624, %v652
        %v655 = vmul.f32 %v647, %v653
        %v656 = vmul.f32 %v648, %v653
        %v658 = vlaneseq
        %v659 = vshrl.u32 %v658, 7
        %v660 = vsub.s32 0, %v659
        %v661 = vrot.slane %v625, %v660
        %v663 = vadd.f32 %v655, %v661
        %v664 = vadd.f32 %v656, %v661
        %v665 = vpack.c.bf16 %v664, %v663
        %v666 = vld [vmem:[#allocation10] sm:$0xff]
        %v667 = vld [vmem:[#allocation10 + $0x8] sm:$0xf]
        %v668 = vld [vmem:[#allocation10 + $0xc] sm:$0xff]
        %v669 = vld [vmem:[#allocation10 + $0x14] sm:$0xf]
        %v670 = vld [vmem:[#allocation10 + $0x18] sm:$0xff]
        %v671 = vld [vmem:[#allocation10 + $0x20] sm:$0xf]
        %v672 = vld [vmem:[#allocation10 + $0x24] sm:$0xff]
        %v673 = vld [vmem:[#allocation10 + $0x2c] sm:$0xf]
        %v674 = vld [vmem:[#allocation10 + $0x30] sm:$0xff]
        %v675 = vld [vmem:[#allocation10 + $0x38] sm:$0xf]
        %v676 = vld [vmem:[#allocation10 + $0x3c] sm:$0xff]
        %v677 = vld [vmem:[#allocation10 + $0x44] sm:$0xf]
        %v678 = vld [vmem:[#allocation10 + $0x48] sm:$0xff]
        %v679 = vld [vmem:[#allocation10 + $0x50] sm:$0xf]
        %v680 = vld [vmem:[#allocation10 + $0x54] sm:$0xff]
        %v681 = vld [vmem:[#allocation10 + $0x5c] sm:$0xf]
        %v682 = vld [vmem:[#allocation10 + $0x60] sm:$0xff]
        %v683 = vld [vmem:[#allocation10 + $0x68] sm:$0xf]
        %v684 = vld [vmem:[#allocation10 + $0x6c] sm:$0xff]
        %v685 = vld [vmem:[#allocation10 + $0x74] sm:$0xf]
        %v686 = vld [vmem:[#allocation10 + $0x78] sm:$0xff]
        %v687 = vld [vmem:[#allocation10 + $0x80] sm:$0xf]
        %v688 = vld [vmem:[#allocation10 + $0x84] sm:$0xff]
        %v689 = vld [vmem:[#allocation10 + $0x8c] sm:$0xf]
        %v690 = vld [vmem:[#allocation10 + $0x90] sm:$0xff]
        %v691 = vld [vmem:[#allocation10 + $0x98] sm:$0xf]
        %v692 = vld [vmem:[#allocation10 + $0x9c] sm:$0xff]
        %v693 = vld [vmem:[#allocation10 + $0xa4] sm:$0xf]
        %v694 = vld [vmem:[#allocation10 + $0xa8] sm:$0xff]
        %v695 = vld [vmem:[#allocation10 + $0xb0] sm:$0xf]
        %v696 = vld [vmem:[#allocation10 + $0xb4] sm:$0xff]
        %v697 = vld [vmem:[#allocation10 + $0xbc] sm:$0xf]
        %v698 = vld [vmem:[%s5] sm:$0x7]
        %v700 = vlaneseq
        %v701 = vshrl.u32 %v700, 7
        %v702 = vsub.s32 0, %v701
        %v703 = vrot.slane %v698, %v702
        %v704 = vlaneseq
        %v705 = vshrl.u32 %v704, 7
        %v706 = vsub.s32 1, %v705
        %v707 = vrot.slane %v698, %v706
        %v708 = vlaneseq
        %v709 = vshrl.u32 %v708, 7
        %v710 = vsub.s32 2, %v709
        %v711 = vrot.slane %v698, %v710
        %v747 = vunpack.c.l.b16 %v666
        %v748 = vunpack.c.h.b16 %v666
        %v749 = vunpack.c.l.b16 %v667
        %v750 = vunpack.c.l.b16 %v668
        %v751 = vunpack.c.h.b16 %v668
        %v752 = vunpack.c.l.b16 %v669
        %v753 = vunpack.c.l.b16 %v670
        %v754 = vunpack.c.h.b16 %v670
        %v755 = vunpack.c.l.b16 %v671
        %v756 = vunpack.c.l.b16 %v672
        %v757 = vunpack.c.h.b16 %v672
        %v758 = vunpack.c.l.b16 %v673
        %v759 = vunpack.c.l.b16 %v674
        %v760 = vunpack.c.h.b16 %v674
        %v761 = vunpack.c.l.b16 %v675
        %v762 = vunpack.c.l.b16 %v676
        %v763 = vunpack.c.h.b16 %v676
        %v764 = vunpack.c.l.b16 %v677
        %v765 = vunpack.c.l.b16 %v678
        %v766 = vunpack.c.h.b16 %v678
        %v767 = vunpack.c.l.b16 %v679
        %v768 = vunpack.c.l.b16 %v680
        %v769 = vunpack.c.h.b16 %v680
        %v770 = vunpack.c.l.b16 %v681
        %v771 = vunpack.c.l.b16 %v682
        %v772 = vunpack.c.h.b16 %v682
        %v773 = vunpack.c.l.b16 %v683
        %v774 = vunpack.c.l.b16 %v684
        %v775 = vunpack.c.h.b16 %v684
        %v776 = vunpack.c.l.b16 %v685
        %v777 = vunpack.c.l.b16 %v686
        %v778 = vunpack.c.h.b16 %v686
        %v779 = vunpack.c.l.b16 %v687
        %v780 = vunpack.c.l.b16 %v688
        %v781 = vunpack.c.h.b16 %v688
        %v782 = vunpack.c.l.b16 %v689
        %v783 = vunpack.c.l.b16 %v690
        %v784 = vunpack.c.h.b16 %v690
        %v785 = vunpack.c.l.b16 %v691
        %v786 = vunpack.c.l.b16 %v692
        %v787 = vunpack.c.h.b16 %v692
        %v788 = vunpack.c.l.b16 %v693
        %v789 = vunpack.c.l.b16 %v694
        %v790 = vunpack.c.h.b16 %v694
        %v791 = vunpack.c.l.b16 %v695
        %v792 = vunpack.c.l.b16 %v696
        %v793 = vunpack.c.h.b16 %v696
        %v794 = vunpack.c.l.b16 %v697
        %v795 = vpack.c.b16 %v750, %v747
        %v796 = vpack.c.b16 %v751, %v748
        %v797 = vpack.c.b16 %v752, %v749
        %v798 = vpack.c.b16 %v756, %v753
        %v799 = vpack.c.b16 %v757, %v754
        %v800 = vpack.c.b16 %v758, %v755
        %v801 = vpack.c.b16 %v762, %v759
        %v802 = vpack.c.b16 %v763, %v760
        %v803 = vpack.c.b16 %v764, %v761
        %v804 = vpack.c.b16 %v768, %v765
        %v805 = vpack.c.b16 %v769, %v766
        %v806 = vpack.c.b16 %v770, %v767
        %v807 = vpack.c.b16 %v774, %v771
        %v808 = vpack.c.b16 %v775, %v772
        %v809 = vpack.c.b16 %v776, %v773
        %v810 = vpack.c.b16 %v780, %v777
        %v811 = vpack.c.b16 %v781, %v778
        %v812 = vpack.c.b16 %v782, %v779
        %v813 = vpack.c.b16 %v786, %v783
        %v814 = vpack.c.b16 %v787, %v784
        %v815 = vpack.c.b16 %v788, %v785
        %v816 = vpack.c.b16 %v792, %v789
        %v817 = vpack.c.b16 %v793, %v790
        %v818 = vpack.c.b16 %v794, %v791
        %843 = vmatprep.subr.bf16.mxu0 %v817
        %844 = vmatpush1.bf16.msra.mxu0 %v816
        %845 = vmatprep.subr.bf16.mxu0 %v814
        %846 = vmatpush1.bf16.msra.mxu0 %v813
        %847 = vmatprep.subr.bf16.mxu0 %v811
        %848 = vmatpush1.bf16.msra.mxu0 %v810
        %849 = vmatprep.subr.bf16.mxu0 %v808
        %850 = vmatpush1.bf16.msra.mxu0 %v807
        %851 = vmatprep.subr.bf16.mxu0 %v805
        %852 = vmatpush1.bf16.msra.mxu0 %v804
        %853 = vmatprep.subr.bf16.mxu0 %v802
        %854 = vmatpush1.bf16.msra.mxu0 %v801
        %855 = vmatprep.subr.bf16.mxu0 %v799
        %856 = vmatpush1.bf16.msra.mxu0 %v798
        %857 = vmatprep.subr.bf16.mxu0 %v796
        %858 = vmatpush1.bf16.msra.mxu0 %v795
        %859 = vmatprep.subr.bf16.mxu0 0
        %860 = vmatpush2.bf16.msra.mxu0 0
        %861 = vmatprep.subr.bf16.mxu0 0
        %862 = vmatpush2.bf16.msra.mxu0 0
        %863 = vmatprep.subr.bf16.mxu0 0
        %864 = vmatpush2.bf16.msra.mxu0 0
        %865 = vmatprep.subr.bf16.mxu0 0
        %866 = vmatpush2.bf16.msra.mxu0 0
        %867 = vmatprep.subr.bf16.mxu0 0
        %868 = vmatpush2.bf16.msra.mxu0 0
        %869 = vmatprep.subr.bf16.mxu0 0
        %870 = vmatpush2.bf16.msra.mxu0 0
        %871 = vmatprep.subr.bf16.mxu0 0
        %872 = vmatpush2.bf16.msra.mxu0 0
        %873 = vmatprep.subr.bf16.mxu0 0
        %874 = vmatpush2.bf16.msra.mxu0 0
        %875 = vmatprep.mubr.bf16.mxu0 0
        %876 = vmatmul.mubr.bf16.gmra.mxu0 %v665
        %v877 = vpop.f32.mrf.mxu0
        %v878 = vadd.f32 %v703, %v877
        %v879 = vpop.f32.mrf.mxu0
        %v880 = vadd.f32 %v707, %v879
        %v881 = vpop.f32.mrf.mxu0
        %v882 = vadd.f32 %v703, %v881
        %v883 = vpop.f32.mrf.mxu0
        %v884 = vadd.f32 %v707, %v883
        %885 = vdwg.mxu0
        %886 = vmatprep.subr.bf16.mxu0 0
        %887 = vmatpush1.bf16.msra.mxu0 %v818
        %888 = vmatprep.subr.bf16.mxu0 0
        %889 = vmatpush1.bf16.msra.mxu0 %v815
        %890 = vmatprep.subr.bf16.mxu0 0
        %891 = vmatpush1.bf16.msra.mxu0 %v812
        %892 = vmatprep.subr.bf16.mxu0 0
        %893 = vmatpush1.bf16.msra.mxu0 %v809
        %894 = vmatprep.subr.bf16.mxu0 0
        %895 = vmatpush1.bf16.msra.mxu0 %v806
        %896 = vmatprep.subr.bf16.mxu0 0
        %897 = vmatpush1.bf16.msra.mxu0 %v803
        %898 = vmatprep.subr.bf16.mxu0 0
        %899 = vmatpush1.bf16.msra.mxu0 %v800
        %900 = vmatprep.subr.bf16.mxu0 0
        %901 = vmatpush1.bf16.msra.mxu0 %v797
        %902 = vmatprep.subr.bf16.mxu0 0
        %903 = vmatpush2.bf16.msra.mxu0 0
        %904 = vmatprep.subr.bf16.mxu0 0
        %905 = vmatpush2.bf16.msra.mxu0 0
        %906 = vmatprep.subr.bf16.mxu0 0
        %907 = vmatpush2.bf16.msra.mxu0 0
        %908 = vmatprep.subr.bf16.mxu0 0
        %909 = vmatpush2.bf16.msra.mxu0 0
        %910 = vmatprep.subr.bf16.mxu0 0
        %911 = vmatpush2.bf16.msra.mxu0 0
        %912 = vmatprep.subr.bf16.mxu0 0
        %913 = vmatpush2.bf16.msra.mxu0 0
        %914 = vmatprep.subr.bf16.mxu0 0
        %915 = vmatpush2.bf16.msra.mxu0 0
        %916 = vmatprep.subr.bf16.mxu0 0
        %917 = vmatpush2.bf16.msra.mxu0 0
        %918 = vmatprep.mubr.bf16.mxu0 0
        %919 = vmatmul.mubr.bf16.gmra.mxu0 %v665
        %v920 = vpop.f32.mrf.mxu0
        %v921 = vadd.f32 %v711, %v920
        %v922 = vpop.f32.mrf.mxu0
        %v923 = vpop.f32.mrf.mxu0
        %v924 = vadd.f32 %v711, %v923
        %v925 = vpop.f32.mrf.mxu0
        %926 = vdwg.mxu0
        %v927 = vpack.c.bf16 %v882, %v878
        %v928 = vpack.c.bf16 %v884, %v880
        %v929 = vpack.c.bf16 %v924, %v921
        %vm930 = vcmask 261120
        %v932 = vsel %vm930, %v927, 0
        %v935 = vsel %vm930, %v928, 0
        %937 = vmatprep.subr.bf16.mxu0 0
        %938 = vmatpush1.bf16.xpose.msra.mxu0 0
        %939 = vmatprep.subr.bf16.mxu0 0
        %940 = vmatpush1.bf16.xpose.msra.mxu0 0
        %941 = vmatprep.subr.bf16.mxu0 0
        %942 = vmatpush1.bf16.xpose.msra.mxu0 0
        %943 = vmatprep.subr.bf16.mxu0 0
        %944 = vmatpush1.bf16.xpose.msra.mxu0 0
        %945 = vmatprep.subr.bf16.mxu0 0
        %946 = vmatpush1.bf16.xpose.msra.mxu0 0
        %947 = vmatprep.subr.bf16.mxu0 0
        %948 = vmatpush1.bf16.xpose.msra.mxu0 0
        %949 = vmatprep.subr.bf16.mxu0 0
        %950 = vmatpush1.bf16.xpose.msra.mxu0 0
        %951 = vmatprep.subr.bf16.mxu0 0
        %952 = vmatpush1.bf16.xpose.msra.mxu0 %v935
        %953 = vmatprep.subr.bf16.mxu0 0
        %954 = vmatpush2.bf16.xpose.msra.mxu0 0
        %955 = vmatprep.subr.bf16.mxu0 0
        %956 = vmatpush2.bf16.xpose.msra.mxu0 0
        %957 = vmatprep.subr.bf16.mxu0 0
        %958 = vmatpush2.bf16.xpose.msra.mxu0 0
        %959 = vmatprep.subr.bf16.mxu0 0
        %960 = vmatpush2.bf16.xpose.msra.mxu0 0
        %961 = vmatprep.subr.bf16.mxu0 0
        %962 = vmatpush2.bf16.xpose.msra.mxu0 0
        %963 = vmatprep.subr.bf16.mxu0 0
        %964 = vmatpush2.bf16.xpose.msra.mxu0 0
        %965 = vmatprep.subr.bf16.mxu0 0
        %966 = vmatpush2.bf16.xpose.msra.mxu0 0
        %967 = vmatprep.subr.bf16.mxu0 0
        %968 = vmatpush2.bf16.xpose.msra.mxu0 0
        %969 = vmatprep.mubr.bf16.mxu0 0
        %970 = vmatmul.mubr.bf16.gmra.mxu0 %v932
        %v971 = vpop.f32.mrf.mxu0
        %v972 = vadd.f32 %v622, %v971
        %v973 = vpop.f32.mrf.mxu0
        %v974 = vpop.f32.mrf.mxu0
        %v975 = vadd.f32 %v623, %v974
        %v976 = vpop.f32.mrf.mxu0
        %977 = vdwg.mxu0
        %vm978 = vcmask 130048
        %v979 = vsel %vm978, %v972, -inf
        %980 = vmax.xlane.f32.xlu0 %v979
        %v981 = vpop.xlane.xlu0 %980
        %v982 = vsel %vm978, %v975, -inf
        %983 = vmax.xlane.f32.xlu0 %v982
        %v984 = vpop.xlane.xlu0 %983
        %v985 = vsub.f32 %v972, %v981
        %v986 = vsub.f32 %v975, %v984
        %v987 = vmul.f32 %v985, 1.442695
        %v988 = vpow.pop %v987
        %v989 = vmul.f32 %v986, 1.442695
        %v990 = vpow.pop %v989
        %v991 = vsel %vm978, %v988, 0.0
        %992 = vadd.xlane.f32.xlu0 %v991
        %v993 = vpop.xlane.xlu0 %992
        %v994 = vsel %vm978, %v990, 0.0
        %995 = vadd.xlane.f32.xlu0 %v994
        %v996 = vpop.xlane.xlu0 %995
        %v997 = vmax.f32 %v993, 1e-30
        %v998 = vmax.f32 %v996, 1e-30
        %v999 = vrcp.pop %v997
        %v1000 = vrcp.pop %v998
        %v1001 = vmul.f32 %v988, %v999
        %v1002 = vmul.f32 %v990, %v1000
        %v1003 = vpack.c.bf16 %v1002, %v1001
        %v1005 = vsel %vm978, %v1003, 0
        %1007 = vmatprep.subr.bf16.mxu0 0
        %1008 = vmatpush1.bf16.msra.mxu0 0
        %1009 = vmatprep.subr.bf16.mxu0 0
        %1010 = vmatpush1.bf16.msra.mxu0 0
        %1011 = vmatprep.subr.bf16.mxu0 0
        %1012 = vmatpush1.bf16.msra.mxu0 0
        %1013 = vmatprep.subr.bf16.mxu0 0
        %1014 = vmatpush1.bf16.msra.mxu0 0
        %1015 = vmatprep.subr.bf16.mxu0 0
        %1016 = vmatpush1.bf16.msra.mxu0 0
        %1017 = vmatprep.subr.bf16.mxu0 0
        %1018 = vmatpush1.bf16.msra.mxu0 0
        %1019 = vmatprep.subr.bf16.mxu0 0
        %1020 = vmatpush1.bf16.msra.mxu0 0
        %1021 = vmatprep.subr.bf16.mxu0 0
        %1022 = vmatpush1.bf16.msra.mxu0 %v929
        %1023 = vmatprep.subr.bf16.mxu0 0
        %1024 = vmatpush2.bf16.msra.mxu0 0
        %1025 = vmatprep.subr.bf16.mxu0 0
        %1026 = vmatpush2.bf16.msra.mxu0 0
        %1027 = vmatprep.subr.bf16.mxu0 0
        %1028 = vmatpush2.bf16.msra.mxu0 0
        %1029 = vmatprep.subr.bf16.mxu0 0
        %1030 = vmatpush2.bf16.msra.mxu0 0
        %1031 = vmatprep.subr.bf16.mxu0 0
        %1032 = vmatpush2.bf16.msra.mxu0 0
        %1033 = vmatprep.subr.bf16.mxu0 0
        %1034 = vmatpush2.bf16.msra.mxu0 0
        %1035 = vmatprep.subr.bf16.mxu0 0
        %1036 = vmatpush2.bf16.msra.mxu0 0
        %1037 = vmatprep.subr.bf16.mxu0 0
        %1038 = vmatpush2.bf16.msra.mxu0 0
        %1039 = vmatprep.mubr.bf16.mxu0 0
        %1040 = vmatmul.mubr.bf16.gmra.mxu0 %v1005
        %v1041 = vpop.f32.mrf.mxu0
        %v1042 = vadd.f32 0.0, %v1041
        %v1043 = vpop.f32.mrf.mxu0
        %v1044 = vpop.f32.mrf.mxu0
        %v1045 = vadd.f32 0.0, %v1044
        %v1046 = vpop.f32.mrf.mxu0
        %1047 = vdwg.mxu0
        %1049 = vrot.lane.b32.xlu0 %v927, 96
        %v1050 = vpop.permute.xlu0 %1049
        %1052 = vrot.lane.b32.xlu0 %v928, 96
        %v1053 = vpop.permute.xlu0 %1052
        %v1055 = vsel %vm930, %v1050, 0
        %v1058 = vsel %vm930, %v1053, 0
        %1060 = vmatprep.subr.bf16.mxu0 0
        %1061 = vmatpush1.bf16.xpose.msra.mxu0 0
        %1062 = vmatprep.subr.bf16.mxu0 0
        %1063 = vmatpush1.bf16.xpose.msra.mxu0 0
        %1064 = vmatprep.subr.bf16.mxu0 0
        %1065 = vmatpush1.bf16.xpose.msra.mxu0 0
        %1066 = vmatprep.subr.bf16.mxu0 0
        %1067 = vmatpush1.bf16.xpose.msra.mxu0 0
        %1068 = vmatprep.subr.bf16.mxu0 0
        %1069 = vmatpush1.bf16.xpose.msra.mxu0 0
        %1070 = vmatprep.subr.bf16.mxu0 0
        %1071 = vmatpush1.bf16.xpose.msra.mxu0 0
        %1072 = vmatprep.subr.bf16.mxu0 0
        %1073 = vmatpush1.bf16.xpose.msra.mxu0 0
        %1074 = vmatprep.subr.bf16.mxu0 0
        %1075 = vmatpush1.bf16.xpose.msra.mxu0 %v1058
        %1076 = vmatprep.subr.bf16.mxu0 0
        %1077 = vmatpush2.bf16.xpose.msra.mxu0 0
        %1078 = vmatprep.subr.bf16.mxu0 0
        %1079 = vmatpush2.bf16.xpose.msra.mxu0 0
        %1080 = vmatprep.subr.bf16.mxu0 0
        %1081 = vmatpush2.bf16.xpose.msra.mxu0 0
        %1082 = vmatprep.subr.bf16.mxu0 0
        %1083 = vmatpush2.bf16.xpose.msra.mxu0 0
        %1084 = vmatprep.subr.bf16.mxu0 0
        %1085 = vmatpush2.bf16.xpose.msra.mxu0 0
        %1086 = vmatprep.subr.bf16.mxu0 0
        %1087 = vmatpush2.bf16.xpose.msra.mxu0 0
        %1088 = vmatprep.subr.bf16.mxu0 0
        %1089 = vmatpush2.bf16.xpose.msra.mxu0 0
        %1090 = vmatprep.subr.bf16.mxu0 0
        %1091 = vmatpush2.bf16.xpose.msra.mxu0 0
        %1092 = vmatprep.mubr.bf16.mxu0 0
        %1093 = vmatmul.mubr.bf16.gmra.mxu0 %v1055
        %v1094 = vpop.f32.mrf.mxu0
        %v1095 = vadd.f32 %v622, %v1094
        %v1096 = vpop.f32.mrf.mxu0
        %v1097 = vpop.f32.mrf.mxu0
        %v1098 = vadd.f32 %v623, %v1097
        %v1099 = vpop.f32.mrf.mxu0
        %1100 = vdwg.mxu0
        %v1101 = vsel %vm978, %v1095, -inf
        %1102 = vmax.xlane.f32.xlu0 %v1101
        %v1103 = vpop.xlane.xlu0 %1102
        %v1104 = vsel %vm978, %v1098, -inf
        %1105 = vmax.xlane.f32.xlu0 %v1104
        %v1106 = vpop.xlane.xlu0 %1105
        %v1107 = vsub.f32 %v1095, %v1103
        %v1108 = vsub.f32 %v1098, %v1106
        %v1109 = vmul.f32 %v1107, 1.442695
        %v1110 = vpow.pop %v1109
        %v1111 = vmul.f32 %v1108, 1.442695
        %v1112 = vpow.pop %v1111
        %v1113 = vsel %vm978, %v1110, 0.0
        %1114 = vadd.xlane.f32.xlu0 %v1113
        %v1115 = vpop.xlane.xlu0 %1114
        %v1116 = vsel %vm978, %v1112, 0.0
        %1117 = vadd.xlane.f32.xlu0 %v1116
        %v1118 = vpop.xlane.xlu0 %1117
        %v1119 = vmax.f32 %v1115, 1e-30
        %v1120 = vmax.f32 %v1118, 1e-30
        %v1121 = vrcp.pop %v1119
        %v1122 = vrcp.pop %v1120
        %v1123 = vmul.f32 %v1110, %v1121
        %v1124 = vmul.f32 %v1112, %v1122
        %v1125 = vpack.c.bf16 %v1124, %v1123
        %1127 = vrot.lane.b32.xlu0 %v929, 96
        %v1128 = vpop.permute.xlu0 %1127
        %v1131 = vsel %vm978, %v1125, 0
        %1133 = vmatprep.subr.bf16.mxu0 0
        %1134 = vmatpush1.bf16.msra.mxu0 0
        %1135 = vmatprep.subr.bf16.mxu0 0
        %1136 = vmatpush1.bf16.msra.mxu0 0
        %1137 = vmatprep.subr.bf16.mxu0 0
        %1138 = vmatpush1.bf16.msra.mxu0 0
        %1139 = vmatprep.subr.bf16.mxu0 0
        %1140 = vmatpush1.bf16.msra.mxu0 0
        %1141 = vmatprep.subr.bf16.mxu0 0
        %1142 = vmatpush1.bf16.msra.mxu0 0
        %1143 = vmatprep.subr.bf16.mxu0 0
        %1144 = vmatpush1.bf16.msra.mxu0 0
        %1145 = vmatprep.subr.bf16.mxu0 0
        %1146 = vmatpush1.bf16.msra.mxu0 0
        %1147 = vmatprep.subr.bf16.mxu0 0
        %1148 = vmatpush1.bf16.msra.mxu0 %v1128
        %1149 = vmatprep.subr.bf16.mxu0 0
        %1150 = vmatpush2.bf16.msra.mxu0 0
        %1151 = vmatprep.subr.bf16.mxu0 0
        %1152 = vmatpush2.bf16.msra.mxu0 0
        %1153 = vmatprep.subr.bf16.mxu0 0
        %1154 = vmatpush2.bf16.msra.mxu0 0
        %1155 = vmatprep.subr.bf16.mxu0 0
        %1156 = vmatpush2.bf16.msra.mxu0 0
        %1157 = vmatprep.subr.bf16.mxu0 0
        %1158 = vmatpush2.bf16.msra.mxu0 0
        %1159 = vmatprep.subr.bf16.mxu0 0
        %1160 = vmatpush2.bf16.msra.mxu0 0
        %1161 = vmatprep.subr.bf16.mxu0 0
        %1162 = vmatpush2.bf16.msra.mxu0 0
        %1163 = vmatprep.subr.bf16.mxu0 0
        %1164 = vmatpush2.bf16.msra.mxu0 0
        %1165 = vmatprep.mubr.bf16.mxu0 0
        %1166 = vmatmul.mubr.bf16.gmra.mxu0 %v1131
        %v1167 = vpop.f32.mrf.mxu0
        %v1168 = vadd.f32 0.0, %v1167
        %v1169 = vpop.f32.mrf.mxu0
        %v1170 = vpop.f32.mrf.mxu0
        %v1171 = vadd.f32 0.0, %v1170
        %v1172 = vpop.f32.mrf.mxu0
        %1173 = vdwg.mxu0
        %1174 = vrot.lane.b32.xlu0 %v927, 64
        %v1175 = vpop.permute.xlu0 %1174
        %1176 = vrot.lane.b32.xlu0 %v928, 64
        %v1177 = vpop.permute.xlu0 %1176
        %v1179 = vsel %vm930, %v1175, 0
        %v1182 = vsel %vm930, %v1177, 0
        %1184 = vmatprep.subr.bf16.mxu0 0
        %1185 = vmatpush1.bf16.xpose.msra.mxu0 0
        %1186 = vmatprep.subr.bf16.mxu0 0
        %1187 = vmatpush1.bf16.xpose.msra.mxu0 0
        %1188 = vmatprep.subr.bf16.mxu0 0
        %1189 = vmatpush1.bf16.xpose.msra.mxu0 0
        %1190 = vmatprep.subr.bf16.mxu0 0
        %1191 = vmatpush1.bf16.xpose.msra.mxu0 0
        %1192 = vmatprep.subr.bf16.mxu0 0
        %1193 = vmatpush1.bf16.xpose.msra.mxu0 0
        %1194 = vmatprep.subr.bf16.mxu0 0
        %1195 = vmatpush1.bf16.xpose.msra.mxu0 0
        %1196 = vmatprep.subr.bf16.mxu0 0
        %1197 = vmatpush1.bf16.xpose.msra.mxu0 0
        %1198 = vmatprep.subr.bf16.mxu0 0
        %1199 = vmatpush1.bf16.xpose.msra.mxu0 %v1182
        %1200 = vmatprep.subr.bf16.mxu0 0
        %1201 = vmatpush2.bf16.xpose.msra.mxu0 0
        %1202 = vmatprep.subr.bf16.mxu0 0
        %1203 = vmatpush2.bf16.xpose.msra.mxu0 0
        %1204 = vmatprep.subr.bf16.mxu0 0
        %1205 = vmatpush2.bf16.xpose.msra.mxu0 0
        %1206 = vmatprep.subr.bf16.mxu0 0
        %1207 = vmatpush2.bf16.xpose.msra.mxu0 0
        %1208 = vmatprep.subr.bf16.mxu0 0
        %1209 = vmatpush2.bf16.xpose.msra.mxu0 0
        %1210 = vmatprep.subr.bf16.mxu0 0
        %1211 = vmatpush2.bf16.xpose.msra.mxu0 0
        %1212 = vmatprep.subr.bf16.mxu0 0
        %1213 = vmatpush2.bf16.xpose.msra.mxu0 0
        %1214 = vmatprep.subr.bf16.mxu0 0
        %1215 = vmatpush2.bf16.xpose.msra.mxu0 0
        %1216 = vmatprep.mubr.bf16.mxu0 0
        %1217 = vmatmul.mubr.bf16.gmra.mxu0 %v1179
        %v1218 = vpop.f32.mrf.mxu0
        %v1219 = vadd.f32 %v622, %v1218
        %v1220 = vpop.f32.mrf.mxu0
        %v1221 = vpop.f32.mrf.mxu0
        %v1222 = vadd.f32 %v623, %v1221
        %v1223 = vpop.f32.mrf.mxu0
        %1224 = vdwg.mxu0
        %v1225 = vsel %vm978, %v1219, -inf
        %1226 = vmax.xlane.f32.xlu0 %v1225
        %v1227 = vpop.xlane.xlu0 %1226
        %v1228 = vsel %vm978, %v1222, -inf
        %1229 = vmax.xlane.f32.xlu0 %v1228
        %v1230 = vpop.xlane.xlu0 %1229
        %v1231 = vsub.f32 %v1219, %v1227
        %v1232 = vsub.f32 %v1222, %v1230
        %v1233 = vmul.f32 %v1231, 1.442695
        %v1234 = vpow.pop %v1233
        %v1235 = vmul.f32 %v1232, 1.442695
        %v1236 = vpow.pop %v1235
        %v1237 = vsel %vm978, %v1234, 0.0
        %1238 = vadd.xlane.f32.xlu0 %v1237
        %v1239 = vpop.xlane.xlu0 %1238
        %v1240 = vsel %vm978, %v1236, 0.0
        %1241 = vadd.xlane.f32.xlu0 %v1240
        %v1242 = vpop.xlane.xlu0 %1241
        %v1243 = vmax.f32 %v1239, 1e-30
        %v1244 = vmax.f32 %v1242, 1e-30
        %v1245 = vrcp.pop %v1243
        %v1246 = vrcp.pop %v1244
        %v1247 = vmul.f32 %v1234, %v1245
        %v1248 = vmul.f32 %v1236, %v1246
        %v1249 = vpack.c.bf16 %v1248, %v1247
        %1250 = vrot.lane.b32.xlu0 %v929, 64
        %v1251 = vpop.permute.xlu0 %1250
        %v1254 = vsel %vm978, %v1249, 0
        %1256 = vmatprep.subr.bf16.mxu0 0
        %1257 = vmatpush1.bf16.msra.mxu0 0
        %1258 = vmatprep.subr.bf16.mxu0 0
        %1259 = vmatpush1.bf16.msra.mxu0 0
        %1260 = vmatprep.subr.bf16.mxu0 0
        %1261 = vmatpush1.bf16.msra.mxu0 0
        %1262 = vmatprep.subr.bf16.mxu0 0
        %1263 = vmatpush1.bf16.msra.mxu0 0
        %1264 = vmatprep.subr.bf16.mxu0 0
        %1265 = vmatpush1.bf16.msra.mxu0 0
        %1266 = vmatprep.subr.bf16.mxu0 0
        %1267 = vmatpush1.bf16.msra.mxu0 0
        %1268 = vmatprep.subr.bf16.mxu0 0
        %1269 = vmatpush1.bf16.msra.mxu0 0
        %1270 = vmatprep.subr.bf16.mxu0 0
        %1271 = vmatpush1.bf16.msra.mxu0 %v1251
        %1272 = vmatprep.subr.bf16.mxu0 0
        %1273 = vmatpush2.bf16.msra.mxu0 0
        %1274 = vmatprep.subr.bf16.mxu0 0
        %1275 = vmatpush2.bf16.msra.mxu0 0
        %1276 = vmatprep.subr.bf16.mxu0 0
        %1277 = vmatpush2.bf16.msra.mxu0 0
        %1278 = vmatprep.subr.bf16.mxu0 0
        %1279 = vmatpush2.bf16.msra.mxu0 0
        %1280 = vmatprep.subr.bf16.mxu0 0
        %1281 = vmatpush2.bf16.msra.mxu0 0
        %1282 = vmatprep.subr.bf16.mxu0 0
        %1283 = vmatpush2.bf16.msra.mxu0 0
        %1284 = vmatprep.subr.bf16.mxu0 0
        %1285 = vmatpush2.bf16.msra.mxu0 0
        %1286 = vmatprep.subr.bf16.mxu0 0
        %1287 = vmatpush2.bf16.msra.mxu0 0
        %1288 = vmatprep.mubr.bf16.mxu0 0
        %1289 = vmatmul.mubr.bf16.gmra.mxu0 %v1254
        %v1290 = vpop.f32.mrf.mxu0
        %v1291 = vadd.f32 0.0, %v1290
        %v1292 = vpop.f32.mrf.mxu0
        %v1293 = vpop.f32.mrf.mxu0
        %v1294 = vadd.f32 0.0, %v1293
        %v1295 = vpop.f32.mrf.mxu0
        %1296 = vdwg.mxu0
        %1297 = vrot.lane.b32.xlu0 %v927, 32
        %v1298 = vpop.permute.xlu0 %1297
        %1299 = vrot.lane.b32.xlu0 %v928, 32
        %v1300 = vpop.permute.xlu0 %1299
        %v1302 = vsel %vm930, %v1298, 0
        %v1305 = vsel %vm930, %v1300, 0
        %1307 = vmatprep.subr.bf16.mxu0 0
        %1308 = vmatpush1.bf16.xpose.msra.mxu0 0
        %1309 = vmatprep.subr.bf16.mxu0 0
        %1310 = vmatpush1.bf16.xpose.msra.mxu0 0
        %1311 = vmatprep.subr.bf16.mxu0 0
        %1312 = vmatpush1.bf16.xpose.msra.mxu0 0
        %1313 = vmatprep.subr.bf16.mxu0 0
        %1314 = vmatpush1.bf16.xpose.msra.mxu0 0
        %1315 = vmatprep.subr.bf16.mxu0 0
        %1316 = vmatpush1.bf16.xpose.msra.mxu0 0
        %1317 = vmatprep.subr.bf16.mxu0 0
        %1318 = vmatpush1.bf16.xpose.msra.mxu0 0
        %1319 = vmatprep.subr.bf16.mxu0 0
        %1320 = vmatpush1.bf16.xpose.msra.mxu0 0
        %1321 = vmatprep.subr.bf16.mxu0 0
        %1322 = vmatpush1.bf16.xpose.msra.mxu0 %v1305
        %1323 = vmatprep.subr.bf16.mxu0 0
        %1324 = vmatpush2.bf16.xpose.msra.mxu0 0
        %1325 = vmatprep.subr.bf16.mxu0 0
        %1326 = vmatpush2.bf16.xpose.msra.mxu0 0
        %1327 = vmatprep.subr.bf16.mxu0 0
        %1328 = vmatpush2.bf16.xpose.msra.mxu0 0
        %1329 = vmatprep.subr.bf16.mxu0 0
        %1330 = vmatpush2.bf16.xpose.msra.mxu0 0
        %1331 = vmatprep.subr.bf16.mxu0 0
        %1332 = vmatpush2.bf16.xpose.msra.mxu0 0
        %1333 = vmatprep.subr.bf16.mxu0 0
        %1334 = vmatpush2.bf16.xpose.msra.mxu0 0
        %1335 = vmatprep.subr.bf16.mxu0 0
        %1336 = vmatpush2.bf16.xpose.msra.mxu0 0
        %1337 = vmatprep.subr.bf16.mxu0 0
        %1338 = vmatpush2.bf16.xpose.msra.mxu0 0
        %1339 = vmatprep.mubr.bf16.mxu0 0
        %1340 = vmatmul.mubr.bf16.gmra.mxu0 %v1302
        %v1341 = vpop.f32.mrf.mxu0
        %v1342 = vadd.f32 %v622, %v1341
        %v1343 = vpop.f32.mrf.mxu0
        %v1344 = vpop.f32.mrf.mxu0
        %v1345 = vadd.f32 %v623, %v1344
        %v1346 = vpop.f32.mrf.mxu0
        %1347 = vdwg.mxu0
        %v1348 = vsel %vm978, %v1342, -inf
        %1349 = vmax.xlane.f32.xlu0 %v1348
        %v1350 = vpop.xlane.xlu0 %1349
        %v1351 = vsel %vm978, %v1345, -inf
        %1352 = vmax.xlane.f32.xlu0 %v1351
        %v1353 = vpop.xlane.xlu0 %1352
        %v1354 = vsub.f32 %v1342, %v1350
        %v1355 = vsub.f32 %v1345, %v1353
        %v1356 = vmul.f32 %v1354, 1.442695
        %v1357 = vpow.pop %v1356
        %v1358 = vmul.f32 %v1355, 1.442695
        %v1359 = vpow.pop %v1358
        %v1360 = vsel %vm978, %v1357, 0.0
        %1361 = vadd.xlane.f32.xlu0 %v1360
        %v1362 = vpop.xlane.xlu0 %1361
        %v1363 = vsel %vm978, %v1359, 0.0
        %1364 = vadd.xlane.f32.xlu0 %v1363
        %v1365 = vpop.xlane.xlu0 %1364
        %v1366 = vmax.f32 %v1362, 1e-30
        %v1367 = vmax.f32 %v1365, 1e-30
        %v1368 = vrcp.pop %v1366
        %v1369 = vrcp.pop %v1367
        %v1370 = vmul.f32 %v1357, %v1368
        %v1371 = vmul.f32 %v1359, %v1369
        %v1372 = vpack.c.bf16 %v1371, %v1370
        %1373 = vrot.lane.b32.xlu0 %v929, 32
        %v1374 = vpop.permute.xlu0 %1373
        %v1377 = vsel %vm978, %v1372, 0
        %1379 = vmatprep.subr.bf16.mxu0 0
        %1380 = vmatpush1.bf16.msra.mxu0 0
        %1381 = vmatprep.subr.bf16.mxu0 0
        %1382 = vmatpush1.bf16.msra.mxu0 0
        %1383 = vmatprep.subr.bf16.mxu0 0
        %1384 = vmatpush1.bf16.msra.mxu0 0
        %1385 = vmatprep.subr.bf16.mxu0 0
        %1386 = vmatpush1.bf16.msra.mxu0 0
        %1387 = vmatprep.subr.bf16.mxu0 0
        %1388 = vmatpush1.bf16.msra.mxu0 0
        %1389 = vmatprep.subr.bf16.mxu0 0
        %1390 = vmatpush1.bf16.msra.mxu0 0
        %1391 = vmatprep.subr.bf16.mxu0 0
        %1392 = vmatpush1.bf16.msra.mxu0 0
        %1393 = vmatprep.subr.bf16.mxu0 0
        %1394 = vmatpush1.bf16.msra.mxu0 %v1374
        %1395 = vmatprep.subr.bf16.mxu0 0
        %1396 = vmatpush2.bf16.msra.mxu0 0
        %1397 = vmatprep.subr.bf16.mxu0 0
        %1398 = vmatpush2.bf16.msra.mxu0 0
        %1399 = vmatprep.subr.bf16.mxu0 0
        %1400 = vmatpush2.bf16.msra.mxu0 0
        %1401 = vmatprep.subr.bf16.mxu0 0
        %1402 = vmatpush2.bf16.msra.mxu0 0
        %1403 = vmatprep.subr.bf16.mxu0 0
        %1404 = vmatpush2.bf16.msra.mxu0 0
        %1405 = vmatprep.subr.bf16.mxu0 0
        %1406 = vmatpush2.bf16.msra.mxu0 0
        %1407 = vmatprep.subr.bf16.mxu0 0
        %1408 = vmatpush2.bf16.msra.mxu0 0
        %1409 = vmatprep.subr.bf16.mxu0 0
        %1410 = vmatpush2.bf16.msra.mxu0 0
        %1411 = vmatprep.mubr.bf16.mxu0 0
        %1412 = vmatmul.mubr.bf16.gmra.mxu0 %v1377
        %v1413 = vpop.f32.mrf.mxu0
        %v1414 = vadd.f32 0.0, %v1413
        %v1415 = vpop.f32.mrf.mxu0
        %v1416 = vpop.f32.mrf.mxu0
        %v1417 = vadd.f32 0.0, %v1416
        %v1418 = vpop.f32.mrf.mxu0
        %1419 = vdwg.mxu0
        %1422 = vrot.lane.b32.xlu0 %v1168, 32
        %v1423 = vpop.permute.xlu0 %1422
        %1424 = vrot.lane.b32.xlu0 %v1171, 32
        %v1425 = vpop.permute.xlu0 %1424
        %1430 = vrot.lane.b32.xlu0 %v1291, 64
        %v1431 = vpop.permute.xlu0 %1430
        %1432 = vrot.lane.b32.xlu0 %v1294, 64
        %v1433 = vpop.permute.xlu0 %1432
        %1438 = vrot.lane.b32.xlu0 %v1414, 96
        %v1439 = vpop.permute.xlu0 %1438
        %1440 = vrot.lane.b32.xlu0 %v1417, 96
        %v1441 = vpop.permute.xlu0 %1440
        %v1444 = vsel %vm930, %v1042, %v1423
        %v1445 = vsel %vm930, %v1045, %v1425
        %vm1446 = vcmask 523264
        %v1447 = vsel %vm1446, %v1444, %v1431
        %v1448 = vsel %vm1446, %v1445, %v1433
        %vm1449 = vcmask 785408
        %v1450 = vsel %vm1449, %v1447, %v1439
        %v1451 = vsel %vm1449, %v1448, %v1441
        %v1452 = vpack.c.bf16 %v1451, %v1450
        %v1453 = vld [vmem:[#allocation11] sm:$0xf]
        %v1454 = vld [vmem:[#allocation11 + $0x4] sm:$0xf]
        %v1455 = vld [vmem:[#allocation11 + $0x8] sm:$0xf]
        %v1456 = vld [vmem:[#allocation11 + $0xc] sm:$0xf]
        %v1457 = vld [vmem:[#allocation11 + $0x10] sm:$0xf]
        %v1458 = vld [vmem:[#allocation11 + $0x14] sm:$0xf]
        %v1459 = vld [vmem:[#allocation11 + $0x18] sm:$0xf]
        %v1460 = vld [vmem:[#allocation11 + $0x1c] sm:$0xf]
        %v1461 = vld [vmem:[#allocation11 + $0x20] sm:$0xf]
        %v1462 = vld [vmem:[#allocation11 + $0x24] sm:$0xf]
        %v1463 = vld [vmem:[#allocation11 + $0x28] sm:$0xf]
        %v1464 = vld [vmem:[#allocation11 + $0x2c] sm:$0xf]
        %v1465 = vld [vmem:[#allocation11 + $0x30] sm:$0xf]
        %v1466 = vld [vmem:[#allocation11 + $0x34] sm:$0xf]
        %v1467 = vld [vmem:[#allocation11 + $0x38] sm:$0xf]
        %v1468 = vld [vmem:[#allocation11 + $0x3c] sm:$0xf]
        %v1469 = vld [vmem:[%s7] sm:$0x1]
        %v1471 = vlaneseq
        %v1472 = vshrl.u32 %v1471, 7
        %v1473 = vsub.s32 0, %v1472
        %v1474 = vrot.slane %v1469, %v1473
        %v1492 = vunpack.c.l.b16 %v1453
        %v1493 = vunpack.c.l.b16 %v1454
        %v1494 = vunpack.c.l.b16 %v1455
        %v1495 = vunpack.c.l.b16 %v1456
        %v1496 = vunpack.c.l.b16 %v1457
        %v1497 = vunpack.c.l.b16 %v1458
        %v1498 = vunpack.c.l.b16 %v1459
        %v1499 = vunpack.c.l.b16 %v1460
        %v1500 = vunpack.c.l.b16 %v1461
        %v1501 = vunpack.c.l.b16 %v1462
        %v1502 = vunpack.c.l.b16 %v1463
        %v1503 = vunpack.c.l.b16 %v1464
        %v1504 = vunpack.c.l.b16 %v1465
        %v1505 = vunpack.c.l.b16 %v1466
        %v1506 = vunpack.c.l.b16 %v1467
        %v1507 = vunpack.c.l.b16 %v1468
        %v1508 = vpack.c.b16 %v1493, %v1492
        %v1509 = vpack.c.b16 %v1495, %v1494
        %v1510 = vpack.c.b16 %v1497, %v1496
        %v1511 = vpack.c.b16 %v1499, %v1498
        %v1512 = vpack.c.b16 %v1501, %v1500
        %v1513 = vpack.c.b16 %v1503, %v1502
        %v1514 = vpack.c.b16 %v1505, %v1504
        %v1515 = vpack.c.b16 %v1507, %v1506
        %1524 = vmatprep.subr.bf16.mxu0 0
        %1525 = vmatpush1.bf16.msra.mxu0 %v1515
        %1526 = vmatprep.subr.bf16.mxu0 0
        %1527 = vmatpush1.bf16.msra.mxu0 %v1514
        %1528 = vmatprep.subr.bf16.mxu0 0
        %1529 = vmatpush1.bf16.msra.mxu0 %v1513
        %1530 = vmatprep.subr.bf16.mxu0 0
        %1531 = vmatpush1.bf16.msra.mxu0 %v1512
        %1532 = vmatprep.subr.bf16.mxu0 0
        %1533 = vmatpush1.bf16.msra.mxu0 %v1511
        %1534 = vmatprep.subr.bf16.mxu0 0
        %1535 = vmatpush1.bf16.msra.mxu0 %v1510
        %1536 = vmatprep.subr.bf16.mxu0 0
        %1537 = vmatpush1.bf16.msra.mxu0 %v1509
        %1538 = vmatprep.subr.bf16.mxu0 0
        %1539 = vmatpush1.bf16.msra.mxu0 %v1508
        %1540 = vmatprep.subr.bf16.mxu0 0
        %1541 = vmatpush2.bf16.msra.mxu0 0
        %1542 = vmatprep.subr.bf16.mxu0 0
        %1543 = vmatpush2.bf16.msra.mxu0 0
        %1544 = vmatprep.subr.bf16.mxu0 0
        %1545 = vmatpush2.bf16.msra.mxu0 0
        %1546 = vmatprep.subr.bf16.mxu0 0
        %1547 = vmatpush2.bf16.msra.mxu0 0
        %1548 = vmatprep.subr.bf16.mxu0 0
        %1549 = vmatpush2.bf16.msra.mxu0 0
        %1550 = vmatprep.subr.bf16.mxu0 0
        %1551 = vmatpush2.bf16.msra.mxu0 0
        %1552 = vmatprep.subr.bf16.mxu0 0
        %1553 = vmatpush2.bf16.msra.mxu0 0
        %1554 = vmatprep.subr.bf16.mxu0 0
        %1555 = vmatpush2.bf16.msra.mxu0 0
        %1556 = vmatprep.mubr.bf16.mxu0 0
        %1557 = vmatmul.mubr.bf16.gmra.mxu0 %v1452
        %v1558 = vpop.f32.mrf.mxu0
        %v1559 = vadd.f32 %v1474, %v1558
        %v1560 = vpop.f32.mrf.mxu0
        %v1561 = vpop.f32.mrf.mxu0
        %v1562 = vadd.f32 %v1474, %v1561
        %v1563 = vpop.f32.mrf.mxu0
        %1564 = vdwg.mxu0
        %v1565 = vadd.f32 %v663, %v1559
        %v1566 = vadd.f32 %v664, %v1562
        %v1567 = vld [vmem:[%s8] sm:$0x1]
        %v1568 = vld [vmem:[%s9] sm:$0x1]
        %1569 = vadd.xlane.f32.xlu0 %v1565
        %v1570 = vpop.xlane.xlu0 %1569
        %1571 = vadd.xlane.f32.xlu0 %v1566
        %v1572 = vpop.xlane.xlu0 %1571
        %v1573 = vmul.f32 %v1570, %v630
        %v1574 = vmul.f32 %v1572, %v630
        %v1575 = vsub.f32 %v1565, %v1573
        %v1576 = vsub.f32 %v1566, %v1574
        %v1577 = vmul.f32 %v1575, %v1575
        %v1578 = vmul.f32 %v1576, %v1576
        %1579 = vadd.xlane.f32.xlu0 %v1577
        %v1580 = vpop.xlane.xlu0 %1579
        %1581 = vadd.xlane.f32.xlu0 %v1578
        %v1582 = vpop.xlane.xlu0 %1581
        %v1583 = vmul.f32 %v1580, %v630
        %v1584 = vmul.f32 %v1582, %v630
        %v1585 = vadd.f32 %v1583, 1e-05
        %v1586 = vadd.f32 %v1584, 1e-05
        %v1587 = vrsqrt.pop %v1585
        %v1588 = vrsqrt.pop %v1586
        %v1589 = vmul.f32 %v1575, %v1587
        %v1590 = vmul.f32 %v1576, %v1588
        %v1592 = vlaneseq
        %v1593 = vshrl.u32 %v1592, 7
        %v1594 = vsub.s32 0, %v1593
        %v1595 = vrot.slane %v1567, %v1594
        %v1597 = vmul.f32 %v1589, %v1595
        %v1598 = vmul.f32 %v1590, %v1595
        %v1600 = vlaneseq
        %v1601 = vshrl.u32 %v1600, 7
        %v1602 = vsub.s32 0, %v1601
        %v1603 = vrot.slane %v1568, %v1602
        %v1605 = vadd.f32 %v1597, %v1603
        %v1606 = vadd.f32 %v1598, %v1603
        %v1607 = vpack.c.bf16 %v1606, %v1605
        %v1608 = vld [vmem:[#allocation13] sm:$0xff]
        %v1609 = vld [vmem:[#allocation13 + $0x8] sm:$0xff]
        %v1610 = vld [vmem:[#allocation13 + $0x10] sm:$0xff]
        %v1611 = vld [vmem:[#allocation13 + $0x18] sm:$0xff]
        %v1612 = vld [vmem:[#allocation13 + $0x20] sm:$0xff]
        %v1613 = vld [vmem:[#allocation13 + $0x28] sm:$0xff]
        %v1614 = vld [vmem:[#allocation13 + $0x30] sm:$0xff]
        %v1615 = vld [vmem:[#allocation13 + $0x38] sm:$0xff]
        %v1616 = vld [vmem:[#allocation13 + $0x40] sm:$0xff]
        %v1617 = vld [vmem:[#allocation13 + $0x48] sm:$0xff]
        %v1618 = vld [vmem:[#allocation13 + $0x50] sm:$0xff]
        %v1619 = vld [vmem:[#allocation13 + $0x58] sm:$0xff]
        %v1620 = vld [vmem:[#allocation13 + $0x60] sm:$0xff]
        %v1621 = vld [vmem:[#allocation13 + $0x68] sm:$0xff]
        %v1622 = vld [vmem:[#allocation13 + $0x70] sm:$0xff]
        %v1623 = vld [vmem:[#allocation13 + $0x78] sm:$0xff]
        %v1624 = vld [vmem:[#allocation13 + $0x80] sm:$0xff]
        %v1625 = vld [vmem:[#allocation13 + $0x88] sm:$0xff]
        %v1626 = vld [vmem:[#allocation13 + $0x90] sm:$0xff]
        %v1627 = vld [vmem:[#allocation13 + $0x98] sm:$0xff]
        %v1628 = vld [vmem:[#allocation13 + $0xa0] sm:$0xff]
        %v1629 = vld [vmem:[#allocation13 + $0xa8] sm:$0xff]
        %v1630 = vld [vmem:[#allocation13 + $0xb0] sm:$0xff]
        %v1631 = vld [vmem:[#allocation13 + $0xb8] sm:$0xff]
        %v1632 = vld [vmem:[#allocation13 + $0xc0] sm:$0xff]
        %v1633 = vld [vmem:[#allocation13 + $0xc8] sm:$0xff]
        %v1634 = vld [vmem:[#allocation13 + $0xd0] sm:$0xff]
        %v1635 = vld [vmem:[#allocation13 + $0xd8] sm:$0xff]
        %v1636 = vld [vmem:[#allocation13 + $0xe0] sm:$0xff]
        %v1637 = vld [vmem:[#allocation13 + $0xe8] sm:$0xff]
        %v1638 = vld [vmem:[#allocation13 + $0xf0] sm:$0xff]
        %v1639 = vld [vmem:[#allocation13 + $0xf8] sm:$0xff]
        %v1640 = vld [vmem:[%s11] sm:$0xf]
        %v1642 = vlaneseq
        %v1643 = vshrl.u32 %v1642, 7
        %v1644 = vsub.s32 0, %v1643
        %v1645 = vrot.slane %v1640, %v1644
        %v1646 = vlaneseq
        %v1647 = vshrl.u32 %v1646, 7
        %v1648 = vsub.s32 1, %v1647
        %v1649 = vrot.slane %v1640, %v1648
        %v1650 = vlaneseq
        %v1651 = vshrl.u32 %v1650, 7
        %v1652 = vsub.s32 2, %v1651
        %v1653 = vrot.slane %v1640, %v1652
        %v1654 = vlaneseq
        %v1655 = vshrl.u32 %v1654, 7
        %v1656 = vsub.s32 3, %v1655
        %v1657 = vrot.slane %v1640, %v1656
        %v1694 = vunpack.c.l.b16 %v1608
        %v1695 = vunpack.c.h.b16 %v1608
        %v1696 = vunpack.c.l.b16 %v1609
        %v1697 = vunpack.c.h.b16 %v1609
        %v1698 = vunpack.c.l.b16 %v1610
        %v1699 = vunpack.c.h.b16 %v1610
        %v1700 = vunpack.c.l.b16 %v1611
        %v1701 = vunpack.c.h.b16 %v1611
        %v1702 = vunpack.c.l.b16 %v1612
        %v1703 = vunpack.c.h.b16 %v1612
        %v1704 = vunpack.c.l.b16 %v1613
        %v1705 = vunpack.c.h.b16 %v1613
        %v1706 = vunpack.c.l.b16 %v1614
        %v1707 = vunpack.c.h.b16 %v1614
        %v1708 = vunpack.c.l.b16 %v1615
        %v1709 = vunpack.c.h.b16 %v1615
        %v1710 = vunpack.c.l.b16 %v1616
        %v1711 = vunpack.c.h.b16 %v1616
        %v1712 = vunpack.c.l.b16 %v1617
        %v1713 = vunpack.c.h.b16 %v1617
        %v1714 = vunpack.c.l.b16 %v1618
        %v1715 = vunpack.c.h.b16 %v1618
        %v1716 = vunpack.c.l.b16 %v1619
        %v1717 = vunpack.c.h.b16 %v1619
        %v1718 = vunpack.c.l.b16 %v1620
        %v1719 = vunpack.c.h.b16 %v1620
        %v1720 = vunpack.c.l.b16 %v1621
        %v1721 = vunpack.c.h.b16 %v1621
        %v1722 = vunpack.c.l.b16 %v1622
        %v1723 = vunpack.c.h.b16 %v1622
        %v1724 = vunpack.c.l.b16 %v1623
        %v1725 = vunpack.c.h.b16 %v1623
        %v1726 = vunpack.c.l.b16 %v1624
        %v1727 = vunpack.c.h.b16 %v1624
        %v1728 = vunpack.c.l.b16 %v1625
        %v1729 = vunpack.c.h.b16 %v1625
        %v1730 = vunpack.c.l.b16 %v1626
        %v1731 = vunpack.c.h.b16 %v1626
        %v1732 = vunpack.c.l.b16 %v1627
        %v1733 = vunpack.c.h.b16 %v1627
        %v1734 = vunpack.c.l.b16 %v1628
        %v1735 = vunpack.c.h.b16 %v1628
        %v1736 = vunpack.c.l.b16 %v1629
        %v1737 = vunpack.c.h.b16 %v1629
        %v1738 = vunpack.c.l.b16 %v1630
        %v1739 = vunpack.c.h.b16 %v1630
        %v1740 = vunpack.c.l.b16 %v1631
        %v1741 = vunpack.c.h.b16 %v1631
        %v1742 = vunpack.c.l.b16 %v1632
        %v1743 = vunpack.c.h.b16 %v1632
        %v1744 = vunpack.c.l.b16 %v1633
        %v1745 = vunpack.c.h.b16 %v1633
        %v1746 = vunpack.c.l.b16 %v1634
        %v1747 = vunpack.c.h.b16 %v1634
        %v1748 = vunpack.c.l.b16 %v1635
        %v1749 = vunpack.c.h.b16 %v1635
        %v1750 = vunpack.c.l.b16 %v1636
        %v1751 = vunpack.c.h.b16 %v1636
        %v1752 = vunpack.c.l.b16 %v1637
        %v1753 = vunpack.c.h.b16 %v1637
        %v1754 = vunpack.c.l.b16 %v1638
        %v1755 = vunpack.c.h.b16 %v1638
        %v1756 = vunpack.c.l.b16 %v1639
        %v1757 = vunpack.c.h.b16 %v1639
        %v1758 = vpack.c.b16 %v1698, %v1694
        %v1759 = vpack.c.b16 %v1699, %v1695
        %v1760 = vpack.c.b16 %v1700, %v1696
        %v1761 = vpack.c.b16 %v1701, %v1697
        %v1762 = vpack.c.b16 %v1706, %v1702
        %v1763 = vpack.c.b16 %v1707, %v1703
        %v1764 = vpack.c.b16 %v1708, %v1704
        %v1765 = vpack.c.b16 %v1709, %v1705
        %v1766 = vpack.c.b16 %v1714, %v1710
        %v1767 = vpack.c.b16 %v1715, %v1711
        %v1768 = vpack.c.b16 %v1716, %v1712
        %v1769 = vpack.c.b16 %v1717, %v1713
        %v1770 = vpack.c.b16 %v1722, %v1718
        %v1771 = vpack.c.b16 %v1723, %v1719
        %v1772 = vpack.c.b16 %v1724, %v1720
        %v1773 = vpack.c.b16 %v1725, %v1721
        %v1774 = vpack.c.b16 %v1730, %v1726
        %v1775 = vpack.c.b16 %v1731, %v1727
        %v1776 = vpack.c.b16 %v1732, %v1728
        %v1777 = vpack.c.b16 %v1733, %v1729
        %v1778 = vpack.c.b16 %v1738, %v1734
        %v1779 = vpack.c.b16 %v1739, %v1735
        %v1780 = vpack.c.b16 %v1740, %v1736
        %v1781 = vpack.c.b16 %v1741, %v1737
        %v1782 = vpack.c.b16 %v1746, %v1742
        %v1783 = vpack.c.b16 %v1747, %v1743
        %v1784 = vpack.c.b16 %v1748, %v1744
        %v1785 = vpack.c.b16 %v1749, %v1745
        %v1786 = vpack.c.b16 %v1754, %v1750
        %v1787 = vpack.c.b16 %v1755, %v1751
        %v1788 = vpack.c.b16 %v1756, %v1752
        %v1789 = vpack.c.b16 %v1757, %v1753
        %1822 = vmatprep.subr.bf16.mxu0 %v1787
        %1823 = vmatpush1.bf16.msra.mxu0 %v1786
        %1824 = vmatprep.subr.bf16.mxu0 %v1783
        %1825 = vmatpush1.bf16.msra.mxu0 %v1782
        %1826 = vmatprep.subr.bf16.mxu0 %v1779
        %1827 = vmatpush1.bf16.msra.mxu0 %v1778
        %1828 = vmatprep.subr.bf16.mxu0 %v1775
        %1829 = vmatpush1.bf16.msra.mxu0 %v1774
        %1830 = vmatprep.subr.bf16.mxu0 %v1771
        %1831 = vmatpush1.bf16.msra.mxu0 %v1770
        %1832 = vmatprep.subr.bf16.mxu0 %v1767
        %1833 = vmatpush1.bf16.msra.mxu0 %v1766
        %1834 = vmatprep.subr.bf16.mxu0 %v1763
        %1835 = vmatpush1.bf16.msra.mxu0 %v1762
        %1836 = vmatprep.subr.bf16.mxu0 %v1759
        %1837 = vmatpush1.bf16.msra.mxu0 %v1758
        %1838 = vmatprep.subr.bf16.mxu0 0
        %1839 = vmatpush2.bf16.msra.mxu0 0
        %1840 = vmatprep.subr.bf16.mxu0 0
        %1841 = vmatpush2.bf16.msra.mxu0 0
        %1842 = vmatprep.subr.bf16.mxu0 0
        %1843 = vmatpush2.bf16.msra.mxu0 0
        %1844 = vmatprep.subr.bf16.mxu0 0
        %1845 = vmatpush2.bf16.msra.mxu0 0
        %1846 = vmatprep.subr.bf16.mxu0 0
        %1847 = vmatpush2.bf16.msra.mxu0 0
        %1848 = vmatprep.subr.bf16.mxu0 0
        %1849 = vmatpush2.bf16.msra.mxu0 0
        %1850 = vmatprep.subr.bf16.mxu0 0
        %1851 = vmatpush2.bf16.msra.mxu0 0
        %1852 = vmatprep.subr.bf16.mxu0 0
        %1853 = vmatpush2.bf16.msra.mxu0 0
        %1854 = vmatprep.mubr.bf16.mxu0 0
        %1855 = vmatmul.mubr.bf16.gmra.mxu0 %v1607
        %v1856 = vpop.f32.mrf.mxu0
        %v1857 = vadd.f32 %v1645, %v1856
        %v1858 = vpop.f32.mrf.mxu0
        %v1859 = vadd.f32 %v1649, %v1858
        %v1860 = vpop.f32.mrf.mxu0
        %v1861 = vadd.f32 %v1645, %v1860
        %v1862 = vpop.f32.mrf.mxu0
        %v1863 = vadd.f32 %v1649, %v1862
        %1864 = vdwg.mxu0
        %1865 = vmatprep.subr.bf16.mxu0 %v1789
        %1866 = vmatpush1.bf16.msra.mxu0 %v1788
        %1867 = vmatprep.subr.bf16.mxu0 %v1785
        %1868 = vmatpush1.bf16.msra.mxu0 %v1784
        %1869 = vmatprep.subr.bf16.mxu0 %v1781
        %1870 = vmatpush1.bf16.msra.mxu0 %v1780
        %1871 = vmatprep.subr.bf16.mxu0 %v1777
        %1872 = vmatpush1.bf16.msra.mxu0 %v1776
        %1873 = vmatprep.subr.bf16.mxu0 %v1773
        %1874 = vmatpush1.bf16.msra.mxu0 %v1772
        %1875 = vmatprep.subr.bf16.mxu0 %v1769
        %1876 = vmatpush1.bf16.msra.mxu0 %v1768
        %1877 = vmatprep.subr.bf16.mxu0 %v1765
        %1878 = vmatpush1.bf16.msra.mxu0 %v1764
        %1879 = vmatprep.subr.bf16.mxu0 %v1761
        %1880 = vmatpush1.bf16.msra.mxu0 %v1760
        %1881 = vmatprep.subr.bf16.mxu0 0
        %1882 = vmatpush2.bf16.msra.mxu0 0
        %1883 = vmatprep.subr.bf16.mxu0 0
        %1884 = vmatpush2.bf16.msra.mxu0 0
        %1885 = vmatprep.subr.bf16.mxu0 0
        %1886 = vmatpush2.bf16.msra.mxu0 0
        %1887 = vmatprep.subr.bf16.mxu0 0
        %1888 = vmatpush2.bf16.msra.mxu0 0
        %1889 = vmatprep.subr.bf16.mxu0 0
        %1890 = vmatpush2.bf16.msra.mxu0 0
        %1891 = vmatprep.subr.bf16.mxu0 0
        %1892 = vmatpush2.bf16.msra.mxu0 0
        %1893 = vmatprep.subr.bf16.mxu0 0
        %1894 = vmatpush2.bf16.msra.mxu0 0
        %1895 = vmatprep.subr.bf16.mxu0 0
        %1896 = vmatpush2.bf16.msra.mxu0 0
        %1897 = vmatprep.mubr.bf16.mxu0 0
        %1898 = vmatmul.mubr.bf16.gmra.mxu0 %v1607
        %v1899 = vpop.f32.mrf.mxu0
        %v1900 = vadd.f32 %v1653, %v1899
        %v1901 = vpop.f32.mrf.mxu0
        %v1902 = vadd.f32 %v1657, %v1901
        %v1903 = vpop.f32.mrf.mxu0
        %v1904 = vadd.f32 %v1653, %v1903
        %v1905 = vpop.f32.mrf.mxu0
        %v1906 = vadd.f32 %v1657, %v1905
        %1907 = vdwg.mxu0
        %v1908 = vmax.f32 %v1857, 0.0
        %v1909 = vmax.f32 %v1859, 0.0
        %v1910 = vmax.f32 %v1900, 0.0
        %v1911 = vmax.f32 %v1902, 0.0
        %v1912 = vmax.f32 %v1861, 0.0
        %v1913 = vmax.f32 %v1863, 0.0
        %v1914 = vmax.f32 %v1904, 0.0
        %v1915 = vmax.f32 %v1906, 0.0
        %v1916 = vpack.c.bf16 %v1912, %v1908
        %v1917 = vpack.c.bf16 %v1913, %v1909
        %v1918 = vpack.c.bf16 %v1914, %v1910
        %v1919 = vpack.c.bf16 %v1915, %v1911
        %v1920 = vld [vmem:[#allocation14] sm:$0xf]
        %v1921 = vld [vmem:[#allocation14 + $0x4] sm:$0xf]
        %v1922 = vld [vmem:[#allocation14 + $0x8] sm:$0xf]
        %v1923 = vld [vmem:[#allocation14 + $0xc] sm:$0xf]
        %v1924 = vld [vmem:[#allocation14 + $0x10] sm:$0xf]
        %v1925 = vld [vmem:[#allocation14 + $0x14] sm:$0xf]
        %v1926 = vld [vmem:[#allocation14 + $0x18] sm:$0xf]
        %v1927 = vld [vmem:[#allocation14 + $0x1c] sm:$0xf]
        %v1928 = vld [vmem:[#allocation14 + $0x20] sm:$0xf]
        %v1929 = vld [vmem:[#allocation14 + $0x24] sm:$0xf]
        %v1930 = vld [vmem:[#allocation14 + $0x28] sm:$0xf]
        %v1931 = vld [vmem:[#allocation14 + $0x2c] sm:$0xf]
        %v1932 = vld [vmem:[#allocation14 + $0x30] sm:$0xf]
        %v1933 = vld [vmem:[#allocation14 + $0x34] sm:$0xf]
        %v1934 = vld [vmem:[#allocation14 + $0x38] sm:$0xf]
        %v1935 = vld [vmem:[#allocation14 + $0x3c] sm:$0xf]
        %v1936 = vld [vmem:[#allocation14 + $0x40] sm:$0xf]
        %v1937 = vld [vmem:[#allocation14 + $0x44] sm:$0xf]
        %v1938 = vld [vmem:[#allocation14 + $0x48] sm:$0xf]
        %v1939 = vld [vmem:[#allocation14 + $0x4c] sm:$0xf]
        %v1940 = vld [vmem:[#allocation14 + $0x50] sm:$0xf]
        %v1941 = vld [vmem:[#allocation14 + $0x54] sm:$0xf]
        %v1942 = vld [vmem:[#allocation14 + $0x58] sm:$0xf]
        %v1943 = vld [vmem:[#allocation14 + $0x5c] sm:$0xf]
        %v1944 = vld [vmem:[#allocation14 + $0x60] sm:$0xf]
        %v1945 = vld [vmem:[#allocation14 + $0x64] sm:$0xf]
        %v1946 = vld [vmem:[#allocation14 + $0x68] sm:$0xf]
        %v1947 = vld [vmem:[#allocation14 + $0x6c] sm:$0xf]
        %v1948 = vld [vmem:[#allocation14 + $0x70] sm:$0xf]
        %v1949 = vld [vmem:[#allocation14 + $0x74] sm:$0xf]
        %v1950 = vld [vmem:[#allocation14 + $0x78] sm:$0xf]
        %v1951 = vld [vmem:[#allocation14 + $0x7c] sm:$0xf]
        %v1952 = vld [vmem:[#allocation14 + $0x80] sm:$0xf]
        %v1953 = vld [vmem:[#allocation14 + $0x84] sm:$0xf]
        %v1954 = vld [vmem:[#allocation14 + $0x88] sm:$0xf]
        %v1955 = vld [vmem:[#allocation14 + $0x8c] sm:$0xf]
        %v1956 = vld [vmem:[#allocation14 + $0x90] sm:$0xf]
        %v1957 = vld [vmem:[#allocation14 + $0x94] sm:$0xf]
        %v1958 = vld [vmem:[#allocation14 + $0x98] sm:$0xf]
        %v1959 = vld [vmem:[#allocation14 + $0x9c] sm:$0xf]
        %v1960 = vld [vmem:[#allocation14 + $0xa0] sm:$0xf]
        %v1961 = vld [vmem:[#allocation14 + $0xa4] sm:$0xf]
        %v1962 = vld [vmem:[#allocation14 + $0xa8] sm:$0xf]
        %v1963 = vld [vmem:[#allocation14 + $0xac] sm:$0xf]
        %v1964 = vld [vmem:[#allocation14 + $0xb0] sm:$0xf]
        %v1965 = vld [vmem:[#allocation14 + $0xb4] sm:$0xf]
        %v1966 = vld [vmem:[#allocation14 + $0xb8] sm:$0xf]
        %v1967 = vld [vmem:[#allocation14 + $0xbc] sm:$0xf]
        %v1968 = vld [vmem:[#allocation14 + $0xc0] sm:$0xf]
        %v1969 = vld [vmem:[#allocation14 + $0xc4] sm:$0xf]
        %v1970 = vld [vmem:[#allocation14 + $0xc8] sm:$0xf]
        %v1971 = vld [vmem:[#allocation14 + $0xcc] sm:$0xf]
        %v1972 = vld [vmem:[#allocation14 + $0xd0] sm:$0xf]
        %v1973 = vld [vmem:[#allocation14 + $0xd4] sm:$0xf]
        %v1974 = vld [vmem:[#allocation14 + $0xd8] sm:$0xf]
        %v1975 = vld [vmem:[#allocation14 + $0xdc] sm:$0xf]
        %v1976 = vld [vmem:[#allocation14 + $0xe0] sm:$0xf]
        %v1977 = vld [vmem:[#allocation14 + $0xe4] sm:$0xf]
        %v1978 = vld [vmem:[#allocation14 + $0xe8] sm:$0xf]
        %v1979 = vld [vmem:[#allocation14 + $0xec] sm:$0xf]
        %v1980 = vld [vmem:[#allocation14 + $0xf0] sm:$0xf]
        %v1981 = vld [vmem:[#allocation14 + $0xf4] sm:$0xf]
        %v1982 = vld [vmem:[#allocation14 + $0xf8] sm:$0xf]
        %v1983 = vld [vmem:[#allocation14 + $0xfc] sm:$0xf]
        %v1984 = vld [vmem:[%s13] sm:$0x1]
        %v1986 = vlaneseq
        %v1987 = vshrl.u32 %v1986, 7
        %v1988 = vsub.s32 0, %v1987
        %v1989 = vrot.slane %v1984, %v1988
        %v2055 = vunpack.c.l.b16 %v1920
        %v2056 = vunpack.c.l.b16 %v1921
        %v2057 = vunpack.c.l.b16 %v1922
        %v2058 = vunpack.c.l.b16 %v1923
        %v2059 = vunpack.c.l.b16 %v1924
        %v2060 = vunpack.c.l.b16 %v1925
        %v2061 = vunpack.c.l.b16 %v1926
        %v2062 = vunpack.c.l.b16 %v1927
        %v2063 = vunpack.c.l.b16 %v1928
        %v2064 = vunpack.c.l.b16 %v1929
        %v2065 = vunpack.c.l.b16 %v1930
        %v2066 = vunpack.c.l.b16 %v1931
        %v2067 = vunpack.c.l.b16 %v1932
        %v2068 = vunpack.c.l.b16 %v1933
        %v2069 = vunpack.c.l.b16 %v1934
        %v2070 = vunpack.c.l.b16 %v1935
        %v2071 = vunpack.c.l.b16 %v1936
        %v2072 = vunpack.c.l.b16 %v1937
        %v2073 = vunpack.c.l.b16 %v1938
        %v2074 = vunpack.c.l.b16 %v1939
        %v2075 = vunpack.c.l.b16 %v1940
        %v2076 = vunpack.c.l.b16 %v1941
        %v2077 = vunpack.c.l.b16 %v1942
        %v2078 = vunpack.c.l.b16 %v1943
        %v2079 = vunpack.c.l.b16 %v1944
        %v2080 = vunpack.c.l.b16 %v1945
        %v2081 = vunpack.c.l.b16 %v1946
        %v2082 = vunpack.c.l.b16 %v1947
        %v2083 = vunpack.c.l.b16 %v1948
        %v2084 = vunpack.c.l.b16 %v1949
        %v2085 = vunpack.c.l.b16 %v1950
        %v2086 = vunpack.c.l.b16 %v1951
        %v2087 = vunpack.c.l.b16 %v1952
        %v2088 = vunpack.c.l.b16 %v1953
        %v2089 = vunpack.c.l.b16 %v1954
        %v2090 = vunpack.c.l.b16 %v1955
        %v2091 = vunpack.c.l.b16 %v1956
        %v2092 = vunpack.c.l.b16 %v1957
        %v2093 = vunpack.c.l.b16 %v1958
        %v2094 = vunpack.c.l.b16 %v1959
        %v2095 = vunpack.c.l.b16 %v1960
        %v2096 = vunpack.c.l.b16 %v1961
        %v2097 = vunpack.c.l.b16 %v1962
        %v2098 = vunpack.c.l.b16 %v1963
        %v2099 = vunpack.c.l.b16 %v1964
        %v2100 = vunpack.c.l.b16 %v1965
        %v2101 = vunpack.c.l.b16 %v1966
        %v2102 = vunpack.c.l.b16 %v1967
        %v2103 = vunpack.c.l.b16 %v1968
        %v2104 = vunpack.c.l.b16 %v1969
        %v2105 = vunpack.c.l.b16 %v1970
        %v2106 = vunpack.c.l.b16 %v1971
        %v2107 = vunpack.c.l.b16 %v1972
        %v2108 = vunpack.c.l.b16 %v1973
        %v2109 = vunpack.c.l.b16 %v1974
        %v2110 = vunpack.c.l.b16 %v1975
        %v2111 = vunpack.c.l.b16 %v1976
        %v2112 = vunpack.c.l.b16 %v1977
        %v2113 = vunpack.c.l.b16 %v1978
        %v2114 = vunpack.c.l.b16 %v1979
        %v2115 = vunpack.c.l.b16 %v1980
        %v2116 = vunpack.c.l.b16 %v1981
        %v2117 = vunpack.c.l.b16 %v1982
        %v2118 = vunpack.c.l.b16 %v1983
        %v2119 = vpack.c.b16 %v2056, %v2055
        %v2120 = vpack.c.b16 %v2058, %v2057
        %v2121 = vpack.c.b16 %v2060, %v2059
        %v2122 = vpack.c.b16 %v2062, %v2061
        %v2123 = vpack.c.b16 %v2064, %v2063
        %v2124 = vpack.c.b16 %v2066, %v2065
        %v2125 = vpack.c.b16 %v2068, %v2067
        %v2126 = vpack.c.b16 %v2070, %v2069
        %v2127 = vpack.c.b16 %v2072, %v2071
        %v2128 = vpack.c.b16 %v2074, %v2073
        %v2129 = vpack.c.b16 %v2076, %v2075
        %v2130 = vpack.c.b16 %v2078, %v2077
        %v2131 = vpack.c.b16 %v2080, %v2079
        %v2132 = vpack.c.b16 %v2082, %v2081
        %v2133 = vpack.c.b16 %v2084, %v2083
        %v2134 = vpack.c.b16 %v2086, %v2085
        %v2135 = vpack.c.b16 %v2088, %v2087
        %v2136 = vpack.c.b16 %v2090, %v2089
        %v2137 = vpack.c.b16 %v2092, %v2091
        %v2138 = vpack.c.b16 %v2094, %v2093
        %v2139 = vpack.c.b16 %v2096, %v2095
        %v2140 = vpack.c.b16 %v2098, %v2097
        %v2141 = vpack.c.b16 %v2100, %v2099
        %v2142 = vpack.c.b16 %v2102, %v2101
        %v2143 = vpack.c.b16 %v2104, %v2103
        %v2144 = vpack.c.b16 %v2106, %v2105
        %v2145 = vpack.c.b16 %v2108, %v2107
        %v2146 = vpack.c.b16 %v2110, %v2109
        %v2147 = vpack.c.b16 %v2112, %v2111
        %v2148 = vpack.c.b16 %v2114, %v2113
        %v2149 = vpack.c.b16 %v2116, %v2115
        %v2150 = vpack.c.b16 %v2118, %v2117
        %2183 = vmatprep.subr.bf16.mxu0 0
        %2184 = vmatpush1.bf16.msra.mxu0 %v2126
        %2185 = vmatprep.subr.bf16.mxu0 0
        %2186 = vmatpush1.bf16.msra.mxu0 %v2125
        %2187 = vmatprep.subr.bf16.mxu0 0
        %2188 = vmatpush1.bf16.msra.mxu0 %v2124
        %2189 = vmatprep.subr.bf16.mxu0 0
        %2190 = vmatpush1.bf16.msra.mxu0 %v2123
        %2191 = vmatprep.subr.bf16.mxu0 0
        %2192 = vmatpush1.bf16.msra.mxu0 %v2122
        %2193 = vmatprep.subr.bf16.mxu0 0
        %2194 = vmatpush1.bf16.msra.mxu0 %v2121
        %2195 = vmatprep.subr.bf16.mxu0 0
        %2196 = vmatpush1.bf16.msra.mxu0 %v2120
        %2197 = vmatprep.subr.bf16.mxu0 0
        %2198 = vmatpush1.bf16.msra.mxu0 %v2119
        %2199 = vmatprep.subr.bf16.mxu0 0
        %2200 = vmatpush2.bf16.msra.mxu0 %v2134
        %2201 = vmatprep.subr.bf16.mxu0 0
        %2202 = vmatpush2.bf16.msra.mxu0 %v2133
        %2203 = vmatprep.subr.bf16.mxu0 0
        %2204 = vmatpush2.bf16.msra.mxu0 %v2132
        %2205 = vmatprep.subr.bf16.mxu0 0
        %2206 = vmatpush2.bf16.msra.mxu0 %v2131
        %2207 = vmatprep.subr.bf16.mxu0 0
        %2208 = vmatpush2.bf16.msra.mxu0 %v2130
        %2209 = vmatprep.subr.bf16.mxu0 0
        %2210 = vmatpush2.bf16.msra.mxu0 %v2129
        %2211 = vmatprep.subr.bf16.mxu0 0
        %2212 = vmatpush2.bf16.msra.mxu0 %v2128
        %2213 = vmatprep.subr.bf16.mxu0 0
        %2214 = vmatpush2.bf16.msra.mxu0 %v2127
        %2215 = vmatprep.mubr.bf16.mxu0 %v1917
        %2216 = vmatmul.mubr.bf16.gmra.mxu0 %v1916
        %v2217 = vpop.f32.mrf.mxu0
        %v2218 = vadd.f32 %v1989, %v2217
        %v2219 = vpop.f32.mrf.mxu0
        %v2220 = vpop.f32.mrf.mxu0
        %v2221 = vadd.f32 %v1989, %v2220
        %v2222 = vpop.f32.mrf.mxu0
        %2223 = vdwg.mxu0
        %2224 = vmatprep.subr.bf16.mxu0 0
        %2225 = vmatpush1.bf16.msra.mxu0 %v2142
        %2226 = vmatprep.subr.bf16.mxu0 0
        %2227 = vmatpush1.bf16.msra.mxu0 %v2141
        %2228 = vmatprep.subr.bf16.mxu0 0
        %2229 = vmatpush1.bf16.msra.mxu0 %v2140
        %2230 = vmatprep.subr.bf16.mxu0 0
        %2231 = vmatpush1.bf16.msra.mxu0 %v2139
        %2232 = vmatprep.subr.bf16.mxu0 0
        %2233 = vmatpush1.bf16.msra.mxu0 %v2138
        %2234 = vmatprep.subr.bf16.mxu0 0
        %2235 = vmatpush1.bf16.msra.mxu0 %v2137
        %2236 = vmatprep.subr.bf16.mxu0 0
        %2237 = vmatpush1.bf16.msra.mxu0 %v2136
        %2238 = vmatprep.subr.bf16.mxu0 0
        %2239 = vmatpush1.bf16.msra.mxu0 %v2135
        %2240 = vmatprep.subr.bf16.mxu0 0
        %2241 = vmatpush2.bf16.msra.mxu0 %v2150
        %2242 = vmatprep.subr.bf16.mxu0 0
        %2243 = vmatpush2.bf16.msra.mxu0 %v2149
        %2244 = vmatprep.subr.bf16.mxu0 0
        %2245 = vmatpush2.bf16.msra.mxu0 %v2148
        %2246 = vmatprep.subr.bf16.mxu0 0
        %2247 = vmatpush2.bf16.msra.mxu0 %v2147
        %2248 = vmatprep.subr.bf16.mxu0 0
        %2249 = vmatpush2.bf16.msra.mxu0 %v2146
        %2250 = vmatprep.subr.bf16.mxu0 0
        %2251 = vmatpush2.bf16.msra.mxu0 %v2145
        %2252 = vmatprep.subr.bf16.mxu0 0
        %2253 = vmatpush2.bf16.msra.mxu0 %v2144
        %2254 = vmatprep.subr.bf16.mxu0 0
        %2255 = vmatpush2.bf16.msra.mxu0 %v2143
        %2256 = vmatprep.mubr.bf16.mxu0 %v1919
        %2257 = vmatmul.mubr.bf16.gmra.mxu0 %v1918
        %v2258 = vpop.f32.mrf.mxu0
        %v2259 = vadd.f32 %v2218, %v2258
        %v2260 = vpop.f32.mrf.mxu0
        %v2261 = vpop.f32.mrf.mxu0
        %v2262 = vadd.f32 %v2221, %v2261
        %v2263 = vpop.f32.mrf.mxu0
        %2264 = vdwg.mxu0
        %v2265 = vadd.f32 %v1605, %v2259
        %v2266 = vadd.f32 %v1606, %v2262
        %2267 = vst [vmem:[%s602] sm:$0xff] %v2265
        %2268 = vst [vmem:[%s602 + $0x8] sm:$0xff] %v2266
        %s2269 = sand.u32 %s349, 1
        %s2270 = scalar_lea.sflag [#allocation4], %s2269
        %s2271 = sand.u32 %s349, 1
        %s2272 = smul.addr %s2271, 16
        %s2273 = scalar_lea.vmem [#allocation16], %s2272
        // Predicated region
        $region109: #{tpu_custom_call.1} parent=75 // pred_check
          %p2274 = pneg %p359
        $region110: #{tpu_custom_call.1} parent=75 // pred_check_branch
          %2276 = sbr.rel (%p2274) target = $region112
        $region111: #{tpu_custom_call.1} parent=75 // pred_region
          %s2278 = ssub.s32 256, 256
          %2279 = vsyncadd %s2270, %s2278
          %s2280 = smul.addr %s37, 2
          %s2281 = smul.addr %s2280, 128
          %s2282 = scalar_lea.hbm %s14, %s2281
          %s2283 = sshll.u32 %s2273, 4
          %s2284 = int_to_ptr.vmem [resolvable:$true] %s2283
          %2289 = dma.vmem_to_hbm [thread:$0]  %s2284, 256, %s2282, %s2270, 128, 128, 8
        $region112: #{tpu_custom_call.1} parent=75 // pred_fallthru
          _
      $region76: #{tpu_custom_call.1} parent=5 // pred_fallthru
        _
      %p2290 = scmp.le.s32.totalorder 2, %s32
      // Predicated region
      $region113: #{tpu_custom_call.1} parent=5 // pred_check
        %p2291 = pneg %p2290
      $region114: #{tpu_custom_call.1} parent=5 // pred_check_branch
        %2293 = sbr.rel (%p2291) target = $region116
      $region115: #{tpu_custom_call.1} parent=5 // pred_region
        %s2294 = ssub.s32 %s32, 2
        // Predicated region
        $region117: #{tpu_custom_call.1} parent=115 // pred_check
          %p2295 = pneg %p365
        $region118: #{tpu_custom_call.1} parent=115 // pred_check_branch
          %2297 = sbr.rel (%p2295) target = $region120
        $region119: #{tpu_custom_call.1} parent=115 // pred_region
          %s2298 = sand.u32 %s350, 1
          %s2299 = scalar_lea.sflag [#allocation4], %s2298
          %s2300 = sand.u32 %s350, 1
          %s2301 = smul.addr %s2300, 16
          %s2302 = scalar_lea.vmem [#allocation16], %s2301
          %2303 = dma.done %s2299, 256
        $region120: #{tpu_custom_call.1} parent=115 // pred_fallthru
          _
      $region116: #{tpu_custom_call.1} parent=5 // pred_fallthru
        _
    $region6: #{tpu_custom_call.1} parent=1 // loop_footer
      %s36 = sadd.s32 1, %s32
    $region7: #{tpu_custom_call.1} parent=1 // loop_footer_branch
      %31 = sbr.rel target = $region3
    $region8: #{tpu_custom_call.1} parent=1 // loop_exit
      _
    %2304 = vsyncpa [#allocation3], 1
    %s2305 = scalar_lea.sflag [#allocation3], 1
    %2306 = vsyncpa %s2305, 1
    %2307 = vsyncpa [#allocation6], 1
    %s2308 = scalar_lea.sflag [#allocation6], 1
    %2309 = vsyncpa %s2308, 1
    %2310 = vsyncpa [#allocation9], 1
    %2311 = vsyncpa [#allocation12], 1
    %2312 = vsyncpa [#allocation15], 1
    %2313 = vsyncpa [#allocation4], 1
    %s2314 = scalar_lea.sflag [#allocation4], 1
    %2315 = vsyncpa %s2314, 1

</llo_original>
